<compile_context>
chip_gen: v7x
topology: tpu7x:2x2x1
jax: 0.10.0
libtpu: 0.0.40
codegen_flags: <defaults>
</compile_context>

<pallas_src>
import math

import jax
import jax.numpy as jnp
from jax.experimental import pallas as pl
from jax.experimental.pallas import tpu as pltpu


# ------------------------------ Pallas kernel -------------------------------

def _vandermonde_kernel(w_ref, basis_ref, k_ref):
    """K_blk = W @ basis : one dense MXU dot per (head-group, L-tile) step.

    w_ref:     (CH*g, 2*g*N)  per-tile block-diagonal LHS  [Re | -Im] of 2*Ceff*dA^{l0}
    basis_ref: (2*g*N, l_blk) per-head-group basis         [Re(dA^d) ; Im(dA^d)]
    k_ref:     (CH, g, l_blk) output tile in the final (CH, H, L) layout
    """
    res = jnp.dot(w_ref[...], basis_ref[...], preferred_element_type=jnp.float32)
    # Split of the sublane axis at a multiple of 8 -> free relayout.
    k_ref[...] = res.reshape(k_ref.shape)


# ------------------------------ tiling planner ------------------------------

def _pick_head_group(H, N):
    """Head-group size g: g | H, (g == H or g % 8 == 0), 2*g*N near MXU depth."""
    cands = [d for d in range(1, H + 1) if H % d == 0 and (d == H or d % 8 == 0)]
    return min(cands, key=lambda gv: (abs(2 * gv * N - 256), gv))


def _plan_tiling(L, depth, out_rows):
    """Pick (l_blk, num_l_tiles, vmem_limit_bytes) from a per-gen VMEM budget."""
    kind = ""
    try:
        kind = jax.devices()[0].device_kind.lower()
    except Exception:  # pragma: no cover - defensive, non-TPU fallback
        pass
    is_v7 = "v7" in kind

    if is_v7:
        # v7x: 64 MiB physical VMEM, two TensorCores -> split the L axis in 2.
        vmem_limit = 40 << 20
        budget = 20 << 20
        want_tiles = 2
    else:
        # v5e/v6e: 128 MiB physical VMEM, single TC -> extra grid steps are
        # pure per-step overhead, so collapse to one tile when it fits.
        vmem_limit = 64 << 20
        budget = 32 << 20
        want_tiles = 1

    lhs_bytes = out_rows * depth * 4 * 2                  # double-buffered LHS block
    per_col = (depth + out_rows) * 4 * 2                  # double-buffered basis + out cols
    l_budget = max(128, ((budget - lhs_bytes) // per_col) // 128 * 128)

    l_per_tile = -(-L // want_tiles)                      # ceil(L / want_tiles)
    l_per_tile = max(128, -(-l_per_tile // 128) * 128)    # round up to 128
    l_blk = min(l_budget, l_per_tile)

    num_tiles = -(-L // l_blk)
    if is_v7 and num_tiles > 1 and num_tiles % 2:
        num_tiles += 1                                    # keep megacore split even
    return l_blk, num_tiles, vmem_limit


# --------------------------- Vandermonde wrapper ----------------------------

def log_vandermonde_pallas(C_cplx, log_dA_cplx, L):
    """2 * Re(einsum('chn,hnl->chl', C, exp(log_dA[...,None]*arange(L)))).

    Returns float32 of shape (CH, H, L).  Arbitrary L is handled by padding
    the lane axis up to num_tiles * l_blk and cropping.
    """
    CH, H, N = C_cplx.shape
    g = _pick_head_group(H, N)
    G = H // g
    depth = 2 * g * N
    rows = CH * g

    l_blk, T, vmem_limit = _plan_tiling(L, depth, rows)
    L_pad = T * l_blk

    cr = jnp.real(C_cplx).astype(jnp.float32)             # (CH, H, N)
    ci = jnp.imag(C_cplx).astype(jnp.float32)
    lr = jnp.real(log_dA_cplx).astype(jnp.float32)        # (H, N)
    li = jnp.imag(log_dA_cplx).astype(jnp.float32)

    # --- per-L-tile complex scales dA^{l0}: transcendentals hoisted to XLA ---
    l0 = jnp.arange(T, dtype=jnp.float32) * float(l_blk)  # (T,)
    smag = jnp.exp(lr[None] * l0[:, None, None])          # (T, H, N)
    sph = li[None] * l0[:, None, None]
    sre = smag * jnp.cos(sph)
    sim = smag * jnp.sin(sph)

    # P = 2 * Ceff * dA^{l0} baked into the LHS -> no per-step s1/s2 DMAs and
    # no in-kernel VPU combine (with T == 1 the scale is the identity).
    pr = 2.0 * (cr[None] * sre[:, None] - ci[None] * sim[:, None])   # (T, CH, H, N)
    pi = 2.0 * (cr[None] * sim[:, None] + ci[None] * sre[:, None])

    # --- block-diagonal (within a head group) LHS: (T*G, CH*g, 2*g*N) --------
    eye = jnp.eye(g, dtype=jnp.float32)
    pr_g = pr.reshape(T, CH, G, g, N).transpose(0, 2, 1, 3, 4)        # (T, G, CH, g, N)
    pi_g = pi.reshape(T, CH, G, g, N).transpose(0, 2, 1, 3, 4)
    w_re = (pr_g[:, :, :, :, None, :] * eye[None, None, None, :, :, None]
            ).reshape(T, G, rows, g * N)
    w_im = (-pi_g[:, :, :, :, None, :] * eye[None, None, None, :, :, None]
            ).reshape(T, G, rows, g * N)
    w = jnp.concatenate([w_re, w_im], axis=-1).reshape(T * G, rows, depth)

    # --- per-head-group basis [Re(dA^d); Im(dA^d)], d in [0, l_blk) ----------
    # Constant across the (inner) L grid axis -> fetched once per head group,
    # VMEM resident.
    d = jnp.arange(l_blk, dtype=jnp.float32)
    mag = jnp.exp(lr[:, :, None] * d)                                 # (H, N, l_blk)
    ph = li[:, :, None] * d
    br = (mag * jnp.cos(ph)).reshape(G, g * N, l_blk)
    bi = (mag * jnp.sin(ph)).reshape(G, g * N, l_blk)
    basis = jnp.concatenate([br, bi], axis=1)                         # (G, 2*g*N, l_blk)

    k_pad = pl.pallas_call(
        _vandermonde_kernel,
        out_shape=jax.ShapeDtypeStruct((CH, H, L_pad), jnp.float32),
        grid=(G, T),
        in_specs=[
            # Small per-(tile, group) LHS block; squeezed leading dim.
            pl.BlockSpec((None, rows, depth), lambda j, i: (i * G + j, 0, 0)),
            # Basis block index depends only on the (outer) head-group axis ->
            # not re-fetched across the inner L loop.
            pl.BlockSpec((None, depth, l_blk), lambda j, i: (j, 0, 0)),
        ],
        # Lane-dense output blocks written directly in the final (CH, H, L)
        # layout -> no external transpose, no masked stores.
        out_specs=pl.BlockSpec((CH, g, l_blk), lambda j, i: (0, j, i)),
        compiler_params=pltpu.CompilerParams(
            dimension_semantics=("parallel", "parallel"),
            vmem_limit_bytes=vmem_limit,
        ),
    )(w, basis)

    return k_pad[..., :L]


# --------------------------- SSKernelDiag forward ---------------------------

def sskernel_diag_forward(params, L, rate=1.0):
    """Pure-JAX glue around the Pallas Vandermonde kernel (bilinear disc)."""
    log_dt = params["log_dt"]          # (H,)
    C = params["C"]                    # (CH, H, N) complex64
    inv_A_real = params["inv_A_real"]  # (n_ssm, N) float32
    A_imag = params["A_imag"]          # (n_ssm, N) float32
    B = params["B"]                    # (n_ssm, N) complex64

    H = log_dt.shape[-1]
    n_ssm, N = inv_A_real.shape
    rep = H // n_ssm

    dt = jnp.exp(log_dt) * rate                            # (H,)
    A = -jnp.exp(inv_A_real) + 1j * A_imag                 # (n_ssm, N) complex
    B_rep = jnp.tile(B, (rep, 1))[None]                    # (1, H, N)
    A = jnp.tile(A, (rep, 1))                              # (H, N)
    dtA = A * dt[:, None]                                  # (H, N)

    # state is None -> B unchanged; fuse B into C.
    Ceff = (B_rep[:, None, :, :] * C).reshape(-1, H, N)    # (CH, H, N)

    # bilinear discretization
    Ceff = Ceff / (1.0 - dtA / 2.0) * dt[:, None]
    dA = (1.0 + dtA / 2.0) / (1.0 - dtA / 2.0)
    log_dA = jnp.log(dA)                                   # (H, N) complex

    K = log_vandermonde_pallas(Ceff, log_dA, L)            # (CH, H, L) float32
    return K, None  # (K, K_state) with state=None


# ----------------------------- pure-JAX reference ---------------------------

def _log_vandermonde_ref(C_cplx, log_dA_cplx, L):
    l = jnp.arange(L, dtype=jnp.float32)
    V = jnp.exp(log_dA_cplx[:, :, None] * l)               # (H, N, L) complex
    return 2.0 * jnp.real(jnp.einsum("chn,hnl->chl", C_cplx, V))


def _forward_ref(params, L, rate=1.0):
    log_dt = params["log_dt"]
    C = params["C"]
    inv_A_real = params["inv_A_real"]
    A_imag = params["A_imag"]
    B = params["B"]
    H = log_dt.shape[-1]
    n_ssm, N = inv_A_real.shape
    rep = H // n_ssm
    dt = jnp.exp(log_dt) * rate
    A = -jnp.exp(inv_A_real) + 1j * A_imag
    B_rep = jnp.tile(B, (rep, 1))[None]
    A = jnp.tile(A, (rep, 1))
    dtA = A * dt[:, None]
    Ceff = (B_rep[:, None, :, :] * C).reshape(-1, H, N)
    Ceff = Ceff / (1.0 - dtA / 2.0) * dt[:, None]
    dA = (1.0 + dtA / 2.0) / (1.0 - dtA / 2.0)
    return _log_vandermonde_ref(Ceff, jnp.log(dA), L)


def make_params(key, H=8, N=16, n_ssm=4, channels=2):
    """Deterministic synthetic init matching SSKernelDiag.__init__ shapes."""
    k1, k2, k3, k4, k5 = jax.random.split(key, 5)
    log_dt = jax.random.uniform(
        k1, (H,), minval=math.log(1e-3), maxval=math.log(1e-1)
    ).astype(jnp.float32)
    # S4D-Lin style A: real = -0.5, imag = pi * n
    A_real = -0.5 * jnp.ones((n_ssm, N), jnp.float32)
    A_imag = math.pi * jnp.broadcast_to(
        jnp.arange(N, dtype=jnp.float32), (n_ssm, N)
    )
    inv_A_real = jnp.log(-A_real)  # real_type == 'exp'
    B = (jax.random.normal(k2, (n_ssm, N), jnp.float32)
         + 1j * jax.random.normal(k3, (n_ssm, N), jnp.float32)) * 0.5
    C = (jax.random.normal(k4, (channels, H, N), jnp.float32)
         + 1j * jax.random.normal(k5, (channels, H, N), jnp.float32)) * 0.5
    return {
        "log_dt": log_dt,
        "inv_A_real": inv_A_real,
        "A_imag": A_imag,
        "B": B.astype(jnp.complex64),
        "C": C.astype(jnp.complex64),
    }


if __name__ == "__main__":
    key = jax.random.PRNGKey(0)
    H, N, n_ssm, channels, L = 8, 16, 4, 2, 2048

    params = make_params(key, H=H, N=N, n_ssm=n_ssm, channels=channels)

    K, K_state = sskernel_diag_forward(params, L)
    K = jax.block_until_ready(K)

    assert K.shape == (channels, H, L), K.shape
    assert K.dtype == jnp.float32
    assert K_state is None

    K_ref = jax.block_until_ready(_forward_ref(params, L))
    if not jnp.allclose(K, K_ref, rtol=1e-3, atol=1e-3):
        max_err = float(jnp.max(jnp.abs(K - K_ref)))
        raise AssertionError(f"Pallas kernel mismatch, max abs err = {max_err}")

    # Non-128-aligned L exercises the new pad-and-crop path.
    L_odd = 1000
    K_odd, _ = sskernel_diag_forward(params, L_odd)
    K_odd = jax.block_until_ready(K_odd)
    assert K_odd.shape == (channels, H, L_odd), K_odd.shape
    K_odd_ref = jax.block_until_ready(_forward_ref(params, L_odd))
    if not jnp.allclose(K_odd, K_odd_ref, rtol=1e-3, atol=1e-3):
        max_err = float(jnp.max(jnp.abs(K_odd - K_odd_ref)))
        raise AssertionError(f"Pallas kernel mismatch (L={L_odd}), max abs err = {max_err}")

    print("KERNEL_OK")
</pallas_src>

<mosaic_0001>
module attributes {stable_mosaic.version = 11 : i64} {
  func.func @_vandermonde_kernel(%arg0: i32, %arg1: i32, %arg2: memref<1x16x256xf32, #tpu.memory_space<vmem>>, %arg3: memref<1x256x2048xf32, #tpu.memory_space<vmem>>, %arg4: memref<2x8x2048xf32, #tpu.memory_space<vmem>>) attributes {dimension_semantics = [#tpu.dimension_semantics<parallel>, #tpu.dimension_semantics<parallel>], iteration_bounds = array<i64: 1, 1>, scalar_prefetch = 0 : i64, scratch_operands = 0 : i64, tpu.core_type = #tpu.core_type<tc>, window_params = [{transform_indices = @transform_0, window_bounds = array<i64: 1, 16, 256>}, {transform_indices = @transform_1, window_bounds = array<i64: 1, 256, 2048>}, {transform_indices = @transform_2, window_bounds = array<i64: 2, 8, 2048>}]} {
    %c0 = arith.constant 0 : index
    %c0_0 = arith.constant 0 : index
    %c0_1 = arith.constant 0 : index
    %0 = vector.load %arg2[%c0, %c0_0, %c0_1] : memref<1x16x256xf32, #tpu.memory_space<vmem>>, vector<1x16x256xf32>
    %1 = vector.shape_cast %0 : vector<1x16x256xf32> to vector<16x256xf32>
    %c0_2 = arith.constant 0 : index
    %c0_3 = arith.constant 0 : index
    %c0_4 = arith.constant 0 : index
    %2 = vector.load %arg3[%c0_2, %c0_3, %c0_4] : memref<1x256x2048xf32, #tpu.memory_space<vmem>>, vector<1x256x2048xf32>
    %3 = vector.shape_cast %2 : vector<1x256x2048xf32> to vector<256x2048xf32>
    %cst = arith.constant dense<0.000000e+00> : vector<16x2048xf32>
    %4 = tpu.matmul %1, %3, %cst {dimension_numbers = #tpu.dot_dimension_numbers<[1], [0], [0], [1], [0, 0, 1, 1], [], []>} : vector<16x256xf32>, vector<256x2048xf32>, vector<16x2048xf32> -> vector<16x2048xf32>
    %5 = vector.shape_cast %4 : vector<16x2048xf32> to vector<2x8x2048xf32>
    %c0_5 = arith.constant 0 : index
    %c0_6 = arith.constant 0 : index
    %c0_7 = arith.constant 0 : index
    %6 = vector.load %arg4[%c0_5, %c0_6, %c0_7] : memref<2x8x2048xf32, #tpu.memory_space<vmem>>, vector<2x8x2048xf32>
    tpu.vector_store %arg4[%c0_5, %c0_6, %c0_7], %5 {strides = array<i32>} : memref<2x8x2048xf32, #tpu.memory_space<vmem>>, vector<2x8x2048xf32>,
    return
  }
  func.func @transform_0(%arg0: i32, %arg1: i32) -> (i32, i32, i32) {
    %c1_i32 = arith.constant 1 : i32
    %0 = arith.muli %arg1, %c1_i32 : i32
    %1 = arith.addi %0, %arg0 : i32
    %c0_i32 = arith.constant 0 : i32
    %c0_i32_0 = arith.constant 0 : i32
    %c0_i32_1 = arith.constant 0 : i32
    return %1, %c0_i32, %c0_i32_0 : i32, i32, i32
  }
  func.func @transform_1(%arg0: i32, %arg1: i32) -> (i32, i32, i32) {
    %c0_i32 = arith.constant 0 : i32
    %c0_i32_0 = arith.constant 0 : i32
    %c0_i32_1 = arith.constant 0 : i32
    return %arg0, %c0_i32, %c0_i32_0 : i32, i32, i32
  }
  func.func @transform_2(%arg0: i32, %arg1: i32) -> (i32, i32, i32) {
    %c0_i32 = arith.constant 0 : i32
    %c0_i32_0 = arith.constant 0 : i32
    return %c0_i32, %arg0, %arg1 : i32, i32, i32
  }
}

</mosaic_0001>

<llo_original>
// kernel: tpu_custom_call.1
$region0: #{tpu_custom_call.1}
  #allocation0 [shape = 'u32[]', space=smem, size = 0x4, offset = 0x4, fixed_abs, tag = 'smem constant byte address 0x4 - core index']
  #allocation1 [shape = 'u32[144,128]{1,0:T(1,128)}', space=vmem, size = 0x12000, scoped, tag = 'internal scratch']
  %s0 = inlined_call_operand.hbm [shape: f32[1,16,256], index: 0, kind: input, shape index: {}]
  %s1 = inlined_call_operand.hbm [shape: f32[1,256,2048], index: 1, kind: input, shape index: {}]
  %s2 = inlined_call_operand.hbm [shape: f32[2,8,2048], index: 2, kind: output, shape index: {}]
  %s3 = sld [smem:[#allocation0]]
  $region26: #{tpu_custom_call.1} parent=0
    _
  %s5 = ssub.s32 1, %s3
  %s6 = scalar_select 0, %s5, %s3
  $region1: #{tpu_custom_call.1} parent=0
    #allocation2 [shape = 'u8[16384]{0}', space=vmem, size = 0x4000, scoped, tag = 'input window, operand 0, single buffered']
    #allocation3 [shape = 's32[1]{0}', space=sflag, size = 0x4, scoped, tag = 'scoped memory for tpu_custom_call.1']
    #allocation4 [shape = 's32[1]{0}', space=sflag, size = 0x4, scoped, tag = 'scoped memory for tpu_custom_call.1']
    #allocation5 [shape = 'u8[2097152]{0}', space=vmem, size = 0x200000, scoped, tag = 'input window, operand 1, single buffered']
    #allocation6 [shape = 's32[1]{0}', space=sflag, size = 0x4, scoped, tag = 'scoped memory for tpu_custom_call.1']
    #allocation7 [shape = 'u8[131072]{0}', space=vmem, size = 0x20000, scoped, tag = 'output window, operand 0, single buffered']
    %7 = vsyncpa [#allocation3], 0
    %8 = vsyncpa [#allocation6], 0
    %9 = vsyncpa [#allocation4], 0
    // Predicated region
    $region2: #{tpu_custom_call.1} parent=1 // pred_check
      _
    $region3: #{tpu_custom_call.1} parent=1 // pred_check_branch
      %11 = sbr.rel (0) target = $region5
    $region4: #{tpu_custom_call.1} parent=1 // pred_region
      %s12 = sadd.s32 0, 0
      %s14 = ssub.s32 512, 512
      %15 = vsyncadd [#allocation3], %s14
      %s16 = smul.addr %s12, 4
      %s17 = smul.addr %s16, 128
      %s18 = scalar_lea.hbm %s0, %s17
      %s19 = sshll.u32 [#allocation2], 4
      %s20 = int_to_ptr.vmem [resolvable:$true] %s19
      %25 = dma.hbm_to_vmem [thread:$0]  %s18, 512, %s20, [#allocation3], 256, 256, 16
    $region5: #{tpu_custom_call.1} parent=1 // pred_fallthru
      _
    // Predicated region
    $region6: #{tpu_custom_call.1} parent=1 // pred_check
      _
    $region7: #{tpu_custom_call.1} parent=1 // pred_check_branch
      %27 = sbr.rel (0) target = $region9
    $region8: #{tpu_custom_call.1} parent=1 // pred_region
      %s29 = ssub.s32 65536, 65536
      %30 = vsyncadd [#allocation6], %s29
      %s31 = sshll.u32 [#allocation5], 4
      %s32 = int_to_ptr.vmem [resolvable:$true] %s31
      %37 = dma.hbm_to_vmem [thread:$0]  %s1, 65536, %s32, [#allocation6], 2048, 2048, 128
    $region9: #{tpu_custom_call.1} parent=1 // pred_fallthru
      _
    // Predicated region
    $region10: #{tpu_custom_call.1} parent=1 // pred_check
      _
    $region11: #{tpu_custom_call.1} parent=1 // pred_check_branch
      %39 = sbr.rel (0) target = $region13
    $region12: #{tpu_custom_call.1} parent=1 // pred_region
      %40 = dma.done [#allocation3], 512
    $region13: #{tpu_custom_call.1} parent=1 // pred_fallthru
      _
    // Predicated region
    $region14: #{tpu_custom_call.1} parent=1 // pred_check
      _
    $region15: #{tpu_custom_call.1} parent=1 // pred_check_branch
      %42 = sbr.rel (0) target = $region17
    $region16: #{tpu_custom_call.1} parent=1 // pred_region
      %43 = dma.done [#allocation6], 65536
    $region17: #{tpu_custom_call.1} parent=1 // pred_fallthru
      _
    %s44 = sadd.s32 0, 0
    %v45 = vld [vmem:[#allocation2] sm:$0xff]
    %v46 = vld [vmem:[#allocation2 + $0x8] sm:$0xff]
    %v47 = vld [vmem:[#allocation2 + $0x10] sm:$0xff]
    %v48 = vld [vmem:[#allocation2 + $0x18] sm:$0xff]
    %v49 = vld [vmem:[#allocation5] sm:$0xff]
    %v50 = vld [vmem:[#allocation5 + $0x8] sm:$0xff]
    %v51 = vld [vmem:[#allocation5 + $0x10] sm:$0xff]
    %v52 = vld [vmem:[#allocation5 + $0x18] sm:$0xff]
    %v53 = vld [vmem:[#allocation5 + $0x20] sm:$0xff]
    %v54 = vld [vmem:[#allocation5 + $0x28] sm:$0xff]
    %v55 = vld [vmem:[#allocation5 + $0x30] sm:$0xff]
    %v56 = vld [vmem:[#allocation5 + $0x38] sm:$0xff]
    %v57 = vld [vmem:[#allocation5 + $0x40] sm:$0xff]
    %v58 = vld [vmem:[#allocation5 + $0x48] sm:$0xff]
    %v59 = vld [vmem:[#allocation5 + $0x50] sm:$0xff]
    %v60 = vld [vmem:[#allocation5 + $0x58] sm:$0xff]
    %v61 = vld [vmem:[#allocation5 + $0x60] sm:$0xff]
    %v62 = vld [vmem:[#allocation5 + $0x68] sm:$0xff]
    %v63 = vld [vmem:[#allocation5 + $0x70] sm:$0xff]
    %v64 = vld [vmem:[#allocation5 + $0x78] sm:$0xff]
    %v65 = vld [vmem:[#allocation5 + $0x80] sm:$0xff]
    %v66 = vld [vmem:[#allocation5 + $0x88] sm:$0xff]
    %v67 = vld [vmem:[#allocation5 + $0x90] sm:$0xff]
    %v68 = vld [vmem:[#allocation5 + $0x98] sm:$0xff]
    %v69 = vld [vmem:[#allocation5 + $0xa0] sm:$0xff]
    %v70 = vld [vmem:[#allocation5 + $0xa8] sm:$0xff]
    %v71 = vld [vmem:[#allocation5 + $0xb0] sm:$0xff]
    %v72 = vld [vmem:[#allocation5 + $0xb8] sm:$0xff]
    %v73 = vld [vmem:[#allocation5 + $0xc0] sm:$0xff]
    %v74 = vld [vmem:[#allocation5 + $0xc8] sm:$0xff]
    %v75 = vld [vmem:[#allocation5 + $0xd0] sm:$0xff]
    %v76 = vld [vmem:[#allocation5 + $0xd8] sm:$0xff]
    %v77 = vld [vmem:[#allocation5 + $0xe0] sm:$0xff]
    %v78 = vld [vmem:[#allocation5 + $0xe8] sm:$0xff]
    %v79 = vld [vmem:[#allocation5 + $0xf0] sm:$0xff]
    %v80 = vld [vmem:[#allocation5 + $0xf8] sm:$0xff]
    %v81 = vld [vmem:[#allocation5 + $0x100] sm:$0xff]
    %v82 = vld [vmem:[#allocation5 + $0x108] sm:$0xff]
    %v83 = vld [vmem:[#allocation5 + $0x110] sm:$0xff]
    %v84 = vld [vmem:[#allocation5 + $0x118] sm:$0xff]
    %v85 = vld [vmem:[#allocation5 + $0x120] sm:$0xff]
    %v86 = vld [vmem:[#allocation5 + $0x128] sm:$0xff]
    %v87 = vld [vmem:[#allocation5 + $0x130] sm:$0xff]
    %v88 = vld [vmem:[#allocation5 + $0x138] sm:$0xff]
    %v89 = vld [vmem:[#allocation5 + $0x140] sm:$0xff]
    %v90 = vld [vmem:[#allocation5 + $0x148] sm:$0xff]
    %v91 = vld [vmem:[#allocation5 + $0x150] sm:$0xff]
    %v92 = vld [vmem:[#allocation5 + $0x158] sm:$0xff]
    %v93 = vld [vmem:[#allocation5 + $0x160] sm:$0xff]
    %v94 = vld [vmem:[#allocation5 + $0x168] sm:$0xff]
    %v95 = vld [vmem:[#allocation5 + $0x170] sm:$0xff]
    %v96 = vld [vmem:[#allocation5 + $0x178] sm:$0xff]
    %v97 = vld [vmem:[#allocation5 + $0x180] sm:$0xff]
    %v98 = vld [vmem:[#allocation5 + $0x188] sm:$0xff]
    %v99 = vld [vmem:[#allocation5 + $0x190] sm:$0xff]
    %v100 = vld [vmem:[#allocation5 + $0x198] sm:$0xff]
    %v101 = vld [vmem:[#allocation5 + $0x1a0] sm:$0xff]
    %v102 = vld [vmem:[#allocation5 + $0x1a8] sm:$0xff]
    %v103 = vld [vmem:[#allocation5 + $0x1b0] sm:$0xff]
    %v104 = vld [vmem:[#allocation5 + $0x1b8] sm:$0xff]
    %v105 = vld [vmem:[#allocation5 + $0x1c0] sm:$0xff]
    %v106 = vld [vmem:[#allocation5 + $0x1c8] sm:$0xff]
    %v107 = vld [vmem:[#allocation5 + $0x1d0] sm:$0xff]
    %v108 = vld [vmem:[#allocation5 + $0x1d8] sm:$0xff]
    %v109 = vld [vmem:[#allocation5 + $0x1e0] sm:$0xff]
    %v110 = vld [vmem:[#allocation5 + $0x1e8] sm:$0xff]
    %v111 = vld [vmem:[#allocation5 + $0x1f0] sm:$0xff]
    %v112 = vld [vmem:[#allocation5 + $0x1f8] sm:$0xff]
    %v113 = vld [vmem:[#allocation5 + $0x200] sm:$0xff]
    %v114 = vld [vmem:[#allocation5 + $0x208] sm:$0xff]
    %v115 = vld [vmem:[#allocation5 + $0x210] sm:$0xff]
    %v116 = vld [vmem:[#allocation5 + $0x218] sm:$0xff]
    %v117 = vld [vmem:[#allocation5 + $0x220] sm:$0xff]
    %v118 = vld [vmem:[#allocation5 + $0x228] sm:$0xff]
    %v119 = vld [vmem:[#allocation5 + $0x230] sm:$0xff]
    %v120 = vld [vmem:[#allocation5 + $0x238] sm:$0xff]
    %v121 = vld [vmem:[#allocation5 + $0x240] sm:$0xff]
    %v122 = vld [vmem:[#allocation5 + $0x248] sm:$0xff]
    %v123 = vld [vmem:[#allocation5 + $0x250] sm:$0xff]
    %v124 = vld [vmem:[#allocation5 + $0x258] sm:$0xff]
    %v125 = vld [vmem:[#allocation5 + $0x260] sm:$0xff]
    %v126 = vld [vmem:[#allocation5 + $0x268] sm:$0xff]
    %v127 = vld [vmem:[#allocation5 + $0x270] sm:$0xff]
    %v128 = vld [vmem:[#allocation5 + $0x278] sm:$0xff]
    %v129 = vld [vmem:[#allocation5 + $0x280] sm:$0xff]
    %v130 = vld [vmem:[#allocation5 + $0x288] sm:$0xff]
    %v131 = vld [vmem:[#allocation5 + $0x290] sm:$0xff]
    %v132 = vld [vmem:[#allocation5 + $0x298] sm:$0xff]
    %v133 = vld [vmem:[#allocation5 + $0x2a0] sm:$0xff]
    %v134 = vld [vmem:[#allocation5 + $0x2a8] sm:$0xff]
    %v135 = vld [vmem:[#allocation5 + $0x2b0] sm:$0xff]
    %v136 = vld [vmem:[#allocation5 + $0x2b8] sm:$0xff]
    %v137 = vld [vmem:[#allocation5 + $0x2c0] sm:$0xff]
    %v138 = vld [vmem:[#allocation5 + $0x2c8] sm:$0xff]
    %v139 = vld [vmem:[#allocation5 + $0x2d0] sm:$0xff]
    %v140 = vld [vmem:[#allocation5 + $0x2d8] sm:$0xff]
    %v141 = vld [vmem:[#allocation5 + $0x2e0] sm:$0xff]
    %v142 = vld [vmem:[#allocation5 + $0x2e8] sm:$0xff]
    %v143 = vld [vmem:[#allocation5 + $0x2f0] sm:$0xff]
    %v144 = vld [vmem:[#allocation5 + $0x2f8] sm:$0xff]
    %v145 = vld [vmem:[#allocation5 + $0x300] sm:$0xff]
    %v146 = vld [vmem:[#allocation5 + $0x308] sm:$0xff]
    %v147 = vld [vmem:[#allocation5 + $0x310] sm:$0xff]
    %v148 = vld [vmem:[#allocation5 + $0x318] sm:$0xff]
    %v149 = vld [vmem:[#allocation5 + $0x320] sm:$0xff]
    %v150 = vld [vmem:[#allocation5 + $0x328] sm:$0xff]
    %v151 = vld [vmem:[#allocation5 + $0x330] sm:$0xff]
    %v152 = vld [vmem:[#allocation5 + $0x338] sm:$0xff]
    %v153 = vld [vmem:[#allocation5 + $0x340] sm:$0xff]
    %v154 = vld [vmem:[#allocation5 + $0x348] sm:$0xff]
    %v155 = vld [vmem:[#allocation5 + $0x350] sm:$0xff]
    %v156 = vld [vmem:[#allocation5 + $0x358] sm:$0xff]
    %v157 = vld [vmem:[#allocation5 + $0x360] sm:$0xff]
    %v158 = vld [vmem:[#allocation5 + $0x368] sm:$0xff]
    %v159 = vld [vmem:[#allocation5 + $0x370] sm:$0xff]
    %v160 = vld [vmem:[#allocation5 + $0x378] sm:$0xff]
    %v161 = vld [vmem:[#allocation5 + $0x380] sm:$0xff]
    %v162 = vld [vmem:[#allocation5 + $0x388] sm:$0xff]
    %v163 = vld [vmem:[#allocation5 + $0x390] sm:$0xff]
    %v164 = vld [vmem:[#allocation5 + $0x398] sm:$0xff]
    %v165 = vld [vmem:[#allocation5 + $0x3a0] sm:$0xff]
    %v166 = vld [vmem:[#allocation5 + $0x3a8] sm:$0xff]
    %v167 = vld [vmem:[#allocation5 + $0x3b0] sm:$0xff]
    %v168 = vld [vmem:[#allocation5 + $0x3b8] sm:$0xff]
    %v169 = vld [vmem:[#allocation5 + $0x3c0] sm:$0xff]
    %v170 = vld [vmem:[#allocation5 + $0x3c8] sm:$0xff]
    %v171 = vld [vmem:[#allocation5 + $0x3d0] sm:$0xff]
    %v172 = vld [vmem:[#allocation5 + $0x3d8] sm:$0xff]
    %v173 = vld [vmem:[#allocation5 + $0x3e0] sm:$0xff]
    %v174 = vld [vmem:[#allocation5 + $0x3e8] sm:$0xff]
    %v175 = vld [vmem:[#allocation5 + $0x3f0] sm:$0xff]
    %v176 = vld [vmem:[#allocation5 + $0x3f8] sm:$0xff]
    %v177 = vld [vmem:[#allocation5 + $0x400] sm:$0xff]
    %v178 = vld [vmem:[#allocation5 + $0x408] sm:$0xff]
    %v179 = vld [vmem:[#allocation5 + $0x410] sm:$0xff]
    %v180 = vld [vmem:[#allocation5 + $0x418] sm:$0xff]
    %v181 = vld [vmem:[#allocation5 + $0x420] sm:$0xff]
    %v182 = vld [vmem:[#allocation5 + $0x428] sm:$0xff]
    %v183 = vld [vmem:[#allocation5 + $0x430] sm:$0xff]
    %v184 = vld [vmem:[#allocation5 + $0x438] sm:$0xff]
    %v185 = vld [vmem:[#allocation5 + $0x440] sm:$0xff]
    %v186 = vld [vmem:[#allocation5 + $0x448] sm:$0xff]
    %v187 = vld [vmem:[#allocation5 + $0x450] sm:$0xff]
    %v188 = vld [vmem:[#allocation5 + $0x458] sm:$0xff]
    %v189 = vld [vmem:[#allocation5 + $0x460] sm:$0xff]
    %v190 = vld [vmem:[#allocation5 + $0x468] sm:$0xff]
    %v191 = vld [vmem:[#allocation5 + $0x470] sm:$0xff]
    %v192 = vld [vmem:[#allocation5 + $0x478] sm:$0xff]
    %v193 = vld [vmem:[#allocation5 + $0x480] sm:$0xff]
    %v194 = vld [vmem:[#allocation5 + $0x488] sm:$0xff]
    %v195 = vld [vmem:[#allocation5 + $0x490] sm:$0xff]
    %v196 = vld [vmem:[#allocation5 + $0x498] sm:$0xff]
    %v197 = vld [vmem:[#allocation5 + $0x4a0] sm:$0xff]
    %v198 = vld [vmem:[#allocation5 + $0x4a8] sm:$0xff]
    %v199 = vld [vmem:[#allocation5 + $0x4b0] sm:$0xff]
    %v200 = vld [vmem:[#allocation5 + $0x4b8] sm:$0xff]
    %v201 = vld [vmem:[#allocation5 + $0x4c0] sm:$0xff]
    %v202 = vld [vmem:[#allocation5 + $0x4c8] sm:$0xff]
    %v203 = vld [vmem:[#allocation5 + $0x4d0] sm:$0xff]
    %v204 = vld [vmem:[#allocation5 + $0x4d8] sm:$0xff]
    %v205 = vld [vmem:[#allocation5 + $0x4e0] sm:$0xff]
    %v206 = vld [vmem:[#allocation5 + $0x4e8] sm:$0xff]
    %v207 = vld [vmem:[#allocation5 + $0x4f0] sm:$0xff]
    %v208 = vld [vmem:[#allocation5 + $0x4f8] sm:$0xff]
    %v209 = vld [vmem:[#allocation5 + $0x500] sm:$0xff]
    %v210 = vld [vmem:[#allocation5 + $0x508] sm:$0xff]
    %v211 = vld [vmem:[#allocation5 + $0x510] sm:$0xff]
    %v212 = vld [vmem:[#allocation5 + $0x518] sm:$0xff]
    %v213 = vld [vmem:[#allocation5 + $0x520] sm:$0xff]
    %v214 = vld [vmem:[#allocation5 + $0x528] sm:$0xff]
    %v215 = vld [vmem:[#allocation5 + $0x530] sm:$0xff]
    %v216 = vld [vmem:[#allocation5 + $0x538] sm:$0xff]
    %v217 = vld [vmem:[#allocation5 + $0x540] sm:$0xff]
    %v218 = vld [vmem:[#allocation5 + $0x548] sm:$0xff]
    %v219 = vld [vmem:[#allocation5 + $0x550] sm:$0xff]
    %v220 = vld [vmem:[#allocation5 + $0x558] sm:$0xff]
    %v221 = vld [vmem:[#allocation5 + $0x560] sm:$0xff]
    %v222 = vld [vmem:[#allocation5 + $0x568] sm:$0xff]
    %v223 = vld [vmem:[#allocation5 + $0x570] sm:$0xff]
    %v224 = vld [vmem:[#allocation5 + $0x578] sm:$0xff]
    %v225 = vld [vmem:[#allocation5 + $0x580] sm:$0xff]
    %v226 = vld [vmem:[#allocation5 + $0x588] sm:$0xff]
    %v227 = vld [vmem:[#allocation5 + $0x590] sm:$0xff]
    %v228 = vld [vmem:[#allocation5 + $0x598] sm:$0xff]
    %v229 = vld [vmem:[#allocation5 + $0x5a0] sm:$0xff]
    %v230 = vld [vmem:[#allocation5 + $0x5a8] sm:$0xff]
    %v231 = vld [vmem:[#allocation5 + $0x5b0] sm:$0xff]
    %v232 = vld [vmem:[#allocation5 + $0x5b8] sm:$0xff]
    %v233 = vld [vmem:[#allocation5 + $0x5c0] sm:$0xff]
    %v234 = vld [vmem:[#allocation5 + $0x5c8] sm:$0xff]
    %v235 = vld [vmem:[#allocation5 + $0x5d0] sm:$0xff]
    %v236 = vld [vmem:[#allocation5 + $0x5d8] sm:$0xff]
    %v237 = vld [vmem:[#allocation5 + $0x5e0] sm:$0xff]
    %v238 = vld [vmem:[#allocation5 + $0x5e8] sm:$0xff]
    %v239 = vld [vmem:[#allocation5 + $0x5f0] sm:$0xff]
    %v240 = vld [vmem:[#allocation5 + $0x5f8] sm:$0xff]
    %v241 = vld [vmem:[#allocation5 + $0x600] sm:$0xff]
    %v242 = vld [vmem:[#allocation5 + $0x608] sm:$0xff]
    %v243 = vld [vmem:[#allocation5 + $0x610] sm:$0xff]
    %v244 = vld [vmem:[#allocation5 + $0x618] sm:$0xff]
    %v245 = vld [vmem:[#allocation5 + $0x620] sm:$0xff]
    %v246 = vld [vmem:[#allocation5 + $0x628] sm:$0xff]
    %v247 = vld [vmem:[#allocation5 + $0x630] sm:$0xff]
    %v248 = vld [vmem:[#allocation5 + $0x638] sm:$0xff]
    %v249 = vld [vmem:[#allocation5 + $0x640] sm:$0xff]
    %v250 = vld [vmem:[#allocation5 + $0x648] sm:$0xff]
    %v251 = vld [vmem:[#allocation5 + $0x650] sm:$0xff]
    %v252 = vld [vmem:[#allocation5 + $0x658] sm:$0xff]
    %v253 = vld [vmem:[#allocation5 + $0x660] sm:$0xff]
    %v254 = vld [vmem:[#allocation5 + $0x668] sm:$0xff]
    %v255 = vld [vmem:[#allocation5 + $0x670] sm:$0xff]
    %v256 = vld [vmem:[#allocation5 + $0x678] sm:$0xff]
    %v257 = vld [vmem:[#allocation5 + $0x680] sm:$0xff]
    %v258 = vld [vmem:[#allocation5 + $0x688] sm:$0xff]
    %v259 = vld [vmem:[#allocation5 + $0x690] sm:$0xff]
    %v260 = vld [vmem:[#allocation5 + $0x698] sm:$0xff]
    %v261 = vld [vmem:[#allocation5 + $0x6a0] sm:$0xff]
    %v262 = vld [vmem:[#allocation5 + $0x6a8] sm:$0xff]
    %v263 = vld [vmem:[#allocation5 + $0x6b0] sm:$0xff]
    %v264 = vld [vmem:[#allocation5 + $0x6b8] sm:$0xff]
    %v265 = vld [vmem:[#allocation5 + $0x6c0] sm:$0xff]
    %v266 = vld [vmem:[#allocation5 + $0x6c8] sm:$0xff]
    %v267 = vld [vmem:[#allocation5 + $0x6d0] sm:$0xff]
    %v268 = vld [vmem:[#allocation5 + $0x6d8] sm:$0xff]
    %v269 = vld [vmem:[#allocation5 + $0x6e0] sm:$0xff]
    %v270 = vld [vmem:[#allocation5 + $0x6e8] sm:$0xff]
    %v271 = vld [vmem:[#allocation5 + $0x6f0] sm:$0xff]
    %v272 = vld [vmem:[#allocation5 + $0x6f8] sm:$0xff]
    %v273 = vld [vmem:[#allocation5 + $0x700] sm:$0xff]
    %v274 = vld [vmem:[#allocation5 + $0x708] sm:$0xff]
    %v275 = vld [vmem:[#allocation5 + $0x710] sm:$0xff]
    %v276 = vld [vmem:[#allocation5 + $0x718] sm:$0xff]
    %v277 = vld [vmem:[#allocation5 + $0x720] sm:$0xff]
    %v278 = vld [vmem:[#allocation5 + $0x728] sm:$0xff]
    %v279 = vld [vmem:[#allocation5 + $0x730] sm:$0xff]
    %v280 = vld [vmem:[#allocation5 + $0x738] sm:$0xff]
    %v281 = vld [vmem:[#allocation5 + $0x740] sm:$0xff]
    %v282 = vld [vmem:[#allocation5 + $0x748] sm:$0xff]
    %v283 = vld [vmem:[#allocation5 + $0x750] sm:$0xff]
    %v284 = vld [vmem:[#allocation5 + $0x758] sm:$0xff]
    %v285 = vld [vmem:[#allocation5 + $0x760] sm:$0xff]
    %v286 = vld [vmem:[#allocation5 + $0x768] sm:$0xff]
    %v287 = vld [vmem:[#allocation5 + $0x770] sm:$0xff]
    %v288 = vld [vmem:[#allocation5 + $0x778] sm:$0xff]
    %v289 = vld [vmem:[#allocation5 + $0x780] sm:$0xff]
    %v290 = vld [vmem:[#allocation5 + $0x788] sm:$0xff]
    %v291 = vld [vmem:[#allocation5 + $0x790] sm:$0xff]
    %v292 = vld [vmem:[#allocation5 + $0x798] sm:$0xff]
    %v293 = vld [vmem:[#allocation5 + $0x7a0] sm:$0xff]
    %v294 = vld [vmem:[#allocation5 + $0x7a8] sm:$0xff]
    %v295 = vld [vmem:[#allocation5 + $0x7b0] sm:$0xff]
    %v296 = vld [vmem:[#allocation5 + $0x7b8] sm:$0xff]
    %v297 = vld [vmem:[#allocation5 + $0x7c0] sm:$0xff]
    %v298 = vld [vmem:[#allocation5 + $0x7c8] sm:$0xff]
    %v299 = vld [vmem:[#allocation5 + $0x7d0] sm:$0xff]
    %v300 = vld [vmem:[#allocation5 + $0x7d8] sm:$0xff]
    %v301 = vld [vmem:[#allocation5 + $0x7e0] sm:$0xff]
    %v302 = vld [vmem:[#allocation5 + $0x7e8] sm:$0xff]
    %v303 = vld [vmem:[#allocation5 + $0x7f0] sm:$0xff]
    %v304 = vld [vmem:[#allocation5 + $0x7f8] sm:$0xff]
    %v305 = vld [vmem:[#allocation5 + $0x800] sm:$0xff]
    %v306 = vld [vmem:[#allocation5 + $0x808] sm:$0xff]
    %v307 = vld [vmem:[#allocation5 + $0x810] sm:$0xff]
    %v308 = vld [vmem:[#allocation5 + $0x818] sm:$0xff]
    %v309 = vld [vmem:[#allocation5 + $0x820] sm:$0xff]
    %v310 = vld [vmem:[#allocation5 + $0x828] sm:$0xff]
    %v311 = vld [vmem:[#allocation5 + $0x830] sm:$0xff]
    %v312 = vld [vmem:[#allocation5 + $0x838] sm:$0xff]
    %v313 = vld [vmem:[#allocation5 + $0x840] sm:$0xff]
    %v314 = vld [vmem:[#allocation5 + $0x848] sm:$0xff]
    %v315 = vld [vmem:[#allocation5 + $0x850] sm:$0xff]
    %v316 = vld [vmem:[#allocation5 + $0x858] sm:$0xff]
    %v317 = vld [vmem:[#allocation5 + $0x860] sm:$0xff]
    %v318 = vld [vmem:[#allocation5 + $0x868] sm:$0xff]
    %v319 = vld [vmem:[#allocation5 + $0x870] sm:$0xff]
    %v320 = vld [vmem:[#allocation5 + $0x878] sm:$0xff]
    %v321 = vld [vmem:[#allocation5 + $0x880] sm:$0xff]
    %v322 = vld [vmem:[#allocation5 + $0x888] sm:$0xff]
    %v323 = vld [vmem:[#allocation5 + $0x890] sm:$0xff]
    %v324 = vld [vmem:[#allocation5 + $0x898] sm:$0xff]
    %v325 = vld [vmem:[#allocation5 + $0x8a0] sm:$0xff]
    %v326 = vld [vmem:[#allocation5 + $0x8a8] sm:$0xff]
    %v327 = vld [vmem:[#allocation5 + $0x8b0] sm:$0xff]
    %v328 = vld [vmem:[#allocation5 + $0x8b8] sm:$0xff]
    %v329 = vld [vmem:[#allocation5 + $0x8c0] sm:$0xff]
    %v330 = vld [vmem:[#allocation5 + $0x8c8] sm:$0xff]
    %v331 = vld [vmem:[#allocation5 + $0x8d0] sm:$0xff]
    %v332 = vld [vmem:[#allocation5 + $0x8d8] sm:$0xff]
    %v333 = vld [vmem:[#allocation5 + $0x8e0] sm:$0xff]
    %v334 = vld [vmem:[#allocation5 + $0x8e8] sm:$0xff]
    %v335 = vld [vmem:[#allocation5 + $0x8f0] sm:$0xff]
    %v336 = vld [vmem:[#allocation5 + $0x8f8] sm:$0xff]
    %v337 = vld [vmem:[#allocation5 + $0x900] sm:$0xff]
    %v338 = vld [vmem:[#allocation5 + $0x908] sm:$0xff]
    %v339 = vld [vmem:[#allocation5 + $0x910] sm:$0xff]
    %v340 = vld [vmem:[#allocation5 + $0x918] sm:$0xff]
    %v341 = vld [vmem:[#allocation5 + $0x920] sm:$0xff]
    %v342 = vld [vmem:[#allocation5 + $0x928] sm:$0xff]
    %v343 = vld [vmem:[#allocation5 + $0x930] sm:$0xff]
    %v344 = vld [vmem:[#allocation5 + $0x938] sm:$0xff]
    %v345 = vld [vmem:[#allocation5 + $0x940] sm:$0xff]
    %v346 = vld [vmem:[#allocation5 + $0x948] sm:$0xff]
    %v347 = vld [vmem:[#allocation5 + $0x950] sm:$0xff]
    %v348 = vld [vmem:[#allocation5 + $0x958] sm:$0xff]
    %v349 = vld [vmem:[#allocation5 + $0x960] sm:$0xff]
    %v350 = vld [vmem:[#allocation5 + $0x968] sm:$0xff]
    %v351 = vld [vmem:[#allocation5 + $0x970] sm:$0xff]
    %v352 = vld [vmem:[#allocation5 + $0x978] sm:$0xff]
    %v353 = vld [vmem:[#allocation5 + $0x980] sm:$0xff]
    %v354 = vld [vmem:[#allocation5 + $0x988] sm:$0xff]
    %v355 = vld [vmem:[#allocation5 + $0x990] sm:$0xff]
    %v356 = vld [vmem:[#allocation5 + $0x998] sm:$0xff]
    %v357 = vld [vmem:[#allocation5 + $0x9a0] sm:$0xff]
    %v358 = vld [vmem:[#allocation5 + $0x9a8] sm:$0xff]
    %v359 = vld [vmem:[#allocation5 + $0x9b0] sm:$0xff]
    %v360 = vld [vmem:[#allocation5 + $0x9b8] sm:$0xff]
    %v361 = vld [vmem:[#allocation5 + $0x9c0] sm:$0xff]
    %v362 = vld [vmem:[#allocation5 + $0x9c8] sm:$0xff]
    %v363 = vld [vmem:[#allocation5 + $0x9d0] sm:$0xff]
    %v364 = vld [vmem:[#allocation5 + $0x9d8] sm:$0xff]
    %v365 = vld [vmem:[#allocation5 + $0x9e0] sm:$0xff]
    %v366 = vld [vmem:[#allocation5 + $0x9e8] sm:$0xff]
    %v367 = vld [vmem:[#allocation5 + $0x9f0] sm:$0xff]
    %v368 = vld [vmem:[#allocation5 + $0x9f8] sm:$0xff]
    %v369 = vld [vmem:[#allocation5 + $0xa00] sm:$0xff]
    %v370 = vld [vmem:[#allocation5 + $0xa08] sm:$0xff]
    %v371 = vld [vmem:[#allocation5 + $0xa10] sm:$0xff]
    %v372 = vld [vmem:[#allocation5 + $0xa18] sm:$0xff]
    %v373 = vld [vmem:[#allocation5 + $0xa20] sm:$0xff]
    %v374 = vld [vmem:[#allocation5 + $0xa28] sm:$0xff]
    %v375 = vld [vmem:[#allocation5 + $0xa30] sm:$0xff]
    %v376 = vld [vmem:[#allocation5 + $0xa38] sm:$0xff]
    %v377 = vld [vmem:[#allocation5 + $0xa40] sm:$0xff]
    %v378 = vld [vmem:[#allocation5 + $0xa48] sm:$0xff]
    %v379 = vld [vmem:[#allocation5 + $0xa50] sm:$0xff]
    %v380 = vld [vmem:[#allocation5 + $0xa58] sm:$0xff]
    %v381 = vld [vmem:[#allocation5 + $0xa60] sm:$0xff]
    %v382 = vld [vmem:[#allocation5 + $0xa68] sm:$0xff]
    %v383 = vld [vmem:[#allocation5 + $0xa70] sm:$0xff]
    %v384 = vld [vmem:[#allocation5 + $0xa78] sm:$0xff]
    %v385 = vld [vmem:[#allocation5 + $0xa80] sm:$0xff]
    %v386 = vld [vmem:[#allocation5 + $0xa88] sm:$0xff]
    %v387 = vld [vmem:[#allocation5 + $0xa90] sm:$0xff]
    %v388 = vld [vmem:[#allocation5 + $0xa98] sm:$0xff]
    %v389 = vld [vmem:[#allocation5 + $0xaa0] sm:$0xff]
    %v390 = vld [vmem:[#allocation5 + $0xaa8] sm:$0xff]
    %v391 = vld [vmem:[#allocation5 + $0xab0] sm:$0xff]
    %v392 = vld [vmem:[#allocation5 + $0xab8] sm:$0xff]
    %v393 = vld [vmem:[#allocation5 + $0xac0] sm:$0xff]
    %v394 = vld [vmem:[#allocation5 + $0xac8] sm:$0xff]
    %v395 = vld [vmem:[#allocation5 + $0xad0] sm:$0xff]
    %v396 = vld [vmem:[#allocation5 + $0xad8] sm:$0xff]
    %v397 = vld [vmem:[#allocation5 + $0xae0] sm:$0xff]
    %v398 = vld [vmem:[#allocation5 + $0xae8] sm:$0xff]
    %v399 = vld [vmem:[#allocation5 + $0xaf0] sm:$0xff]
    %v400 = vld [vmem:[#allocation5 + $0xaf8] sm:$0xff]
    %v401 = vld [vmem:[#allocation5 + $0xb00] sm:$0xff]
    %v402 = vld [vmem:[#allocation5 + $0xb08] sm:$0xff]
    %v403 = vld [vmem:[#allocation5 + $0xb10] sm:$0xff]
    %v404 = vld [vmem:[#allocation5 + $0xb18] sm:$0xff]
    %v405 = vld [vmem:[#allocation5 + $0xb20] sm:$0xff]
    %v406 = vld [vmem:[#allocation5 + $0xb28] sm:$0xff]
    %v407 = vld [vmem:[#allocation5 + $0xb30] sm:$0xff]
    %v408 = vld [vmem:[#allocation5 + $0xb38] sm:$0xff]
    %v409 = vld [vmem:[#allocation5 + $0xb40] sm:$0xff]
    %v410 = vld [vmem:[#allocation5 + $0xb48] sm:$0xff]
    %v411 = vld [vmem:[#allocation5 + $0xb50] sm:$0xff]
    %v412 = vld [vmem:[#allocation5 + $0xb58] sm:$0xff]
    %v413 = vld [vmem:[#allocation5 + $0xb60] sm:$0xff]
    %v414 = vld [vmem:[#allocation5 + $0xb68] sm:$0xff]
    %v415 = vld [vmem:[#allocation5 + $0xb70] sm:$0xff]
    %v416 = vld [vmem:[#allocation5 + $0xb78] sm:$0xff]
    %v417 = vld [vmem:[#allocation5 + $0xb80] sm:$0xff]
    %v418 = vld [vmem:[#allocation5 + $0xb88] sm:$0xff]
    %v419 = vld [vmem:[#allocation5 + $0xb90] sm:$0xff]
    %v420 = vld [vmem:[#allocation5 + $0xb98] sm:$0xff]
    %v421 = vld [vmem:[#allocation5 + $0xba0] sm:$0xff]
    %v422 = vld [vmem:[#allocation5 + $0xba8] sm:$0xff]
    %v423 = vld [vmem:[#allocation5 + $0xbb0] sm:$0xff]
    %v424 = vld [vmem:[#allocation5 + $0xbb8] sm:$0xff]
    %v425 = vld [vmem:[#allocation5 + $0xbc0] sm:$0xff]
    %v426 = vld [vmem:[#allocation5 + $0xbc8] sm:$0xff]
    %v427 = vld [vmem:[#allocation5 + $0xbd0] sm:$0xff]
    %v428 = vld [vmem:[#allocation5 + $0xbd8] sm:$0xff]
    %v429 = vld [vmem:[#allocation5 + $0xbe0] sm:$0xff]
    %v430 = vld [vmem:[#allocation5 + $0xbe8] sm:$0xff]
    %v431 = vld [vmem:[#allocation5 + $0xbf0] sm:$0xff]
    %v432 = vld [vmem:[#allocation5 + $0xbf8] sm:$0xff]
    %v433 = vld [vmem:[#allocation5 + $0xc00] sm:$0xff]
    %v434 = vld [vmem:[#allocation5 + $0xc08] sm:$0xff]
    %v435 = vld [vmem:[#allocation5 + $0xc10] sm:$0xff]
    %v436 = vld [vmem:[#allocation5 + $0xc18] sm:$0xff]
    %v437 = vld [vmem:[#allocation5 + $0xc20] sm:$0xff]
    %v438 = vld [vmem:[#allocation5 + $0xc28] sm:$0xff]
    %v439 = vld [vmem:[#allocation5 + $0xc30] sm:$0xff]
    %v440 = vld [vmem:[#allocation5 + $0xc38] sm:$0xff]
    %v441 = vld [vmem:[#allocation5 + $0xc40] sm:$0xff]
    %v442 = vld [vmem:[#allocation5 + $0xc48] sm:$0xff]
    %v443 = vld [vmem:[#allocation5 + $0xc50] sm:$0xff]
    %v444 = vld [vmem:[#allocation5 + $0xc58] sm:$0xff]
    %v445 = vld [vmem:[#allocation5 + $0xc60] sm:$0xff]
    %v446 = vld [vmem:[#allocation5 + $0xc68] sm:$0xff]
    %v447 = vld [vmem:[#allocation5 + $0xc70] sm:$0xff]
    %v448 = vld [vmem:[#allocation5 + $0xc78] sm:$0xff]
    %v449 = vld [vmem:[#allocation5 + $0xc80] sm:$0xff]
    %v450 = vld [vmem:[#allocation5 + $0xc88] sm:$0xff]
    %v451 = vld [vmem:[#allocation5 + $0xc90] sm:$0xff]
    %v452 = vld [vmem:[#allocation5 + $0xc98] sm:$0xff]
    %v453 = vld [vmem:[#allocation5 + $0xca0] sm:$0xff]
    %v454 = vld [vmem:[#allocation5 + $0xca8] sm:$0xff]
    %v455 = vld [vmem:[#allocation5 + $0xcb0] sm:$0xff]
    %v456 = vld [vmem:[#allocation5 + $0xcb8] sm:$0xff]
    %v457 = vld [vmem:[#allocation5 + $0xcc0] sm:$0xff]
    %v458 = vld [vmem:[#allocation5 + $0xcc8] sm:$0xff]
    %v459 = vld [vmem:[#allocation5 + $0xcd0] sm:$0xff]
    %v460 = vld [vmem:[#allocation5 + $0xcd8] sm:$0xff]
    %v461 = vld [vmem:[#allocation5 + $0xce0] sm:$0xff]
    %v462 = vld [vmem:[#allocation5 + $0xce8] sm:$0xff]
    %v463 = vld [vmem:[#allocation5 + $0xcf0] sm:$0xff]
    %v464 = vld [vmem:[#allocation5 + $0xcf8] sm:$0xff]
    %v465 = vld [vmem:[#allocation5 + $0xd00] sm:$0xff]
    %v466 = vld [vmem:[#allocation5 + $0xd08] sm:$0xff]
    %v467 = vld [vmem:[#allocation5 + $0xd10] sm:$0xff]
    %v468 = vld [vmem:[#allocation5 + $0xd18] sm:$0xff]
    %v469 = vld [vmem:[#allocation5 + $0xd20] sm:$0xff]
    %v470 = vld [vmem:[#allocation5 + $0xd28] sm:$0xff]
    %v471 = vld [vmem:[#allocation5 + $0xd30] sm:$0xff]
    %v472 = vld [vmem:[#allocation5 + $0xd38] sm:$0xff]
    %v473 = vld [vmem:[#allocation5 + $0xd40] sm:$0xff]
    %v474 = vld [vmem:[#allocation5 + $0xd48] sm:$0xff]
    %v475 = vld [vmem:[#allocation5 + $0xd50] sm:$0xff]
    %v476 = vld [vmem:[#allocation5 + $0xd58] sm:$0xff]
    %v477 = vld [vmem:[#allocation5 + $0xd60] sm:$0xff]
    %v478 = vld [vmem:[#allocation5 + $0xd68] sm:$0xff]
    %v479 = vld [vmem:[#allocation5 + $0xd70] sm:$0xff]
    %v480 = vld [vmem:[#allocation5 + $0xd78] sm:$0xff]
    %v481 = vld [vmem:[#allocation5 + $0xd80] sm:$0xff]
    %v482 = vld [vmem:[#allocation5 + $0xd88] sm:$0xff]
    %v483 = vld [vmem:[#allocation5 + $0xd90] sm:$0xff]
    %v484 = vld [vmem:[#allocation5 + $0xd98] sm:$0xff]
    %v485 = vld [vmem:[#allocation5 + $0xda0] sm:$0xff]
    %v486 = vld [vmem:[#allocation5 + $0xda8] sm:$0xff]
    %v487 = vld [vmem:[#allocation5 + $0xdb0] sm:$0xff]
    %v488 = vld [vmem:[#allocation5 + $0xdb8] sm:$0xff]
    %v489 = vld [vmem:[#allocation5 + $0xdc0] sm:$0xff]
    %v490 = vld [vmem:[#allocation5 + $0xdc8] sm:$0xff]
    %v491 = vld [vmem:[#allocation5 + $0xdd0] sm:$0xff]
    %v492 = vld [vmem:[#allocation5 + $0xdd8] sm:$0xff]
    %v493 = vld [vmem:[#allocation5 + $0xde0] sm:$0xff]
    %v494 = vld [vmem:[#allocation5 + $0xde8] sm:$0xff]
    %v495 = vld [vmem:[#allocation5 + $0xdf0] sm:$0xff]
    %v496 = vld [vmem:[#allocation5 + $0xdf8] sm:$0xff]
    %v497 = vld [vmem:[#allocation5 + $0xe00] sm:$0xff]
    %v498 = vld [vmem:[#allocation5 + $0xe08] sm:$0xff]
    %v499 = vld [vmem:[#allocation5 + $0xe10] sm:$0xff]
    %v500 = vld [vmem:[#allocation5 + $0xe18] sm:$0xff]
    %v501 = vld [vmem:[#allocation5 + $0xe20] sm:$0xff]
    %v502 = vld [vmem:[#allocation5 + $0xe28] sm:$0xff]
    %v503 = vld [vmem:[#allocation5 + $0xe30] sm:$0xff]
    %v504 = vld [vmem:[#allocation5 + $0xe38] sm:$0xff]
    %v505 = vld [vmem:[#allocation5 + $0xe40] sm:$0xff]
    %v506 = vld [vmem:[#allocation5 + $0xe48] sm:$0xff]
    %v507 = vld [vmem:[#allocation5 + $0xe50] sm:$0xff]
    %v508 = vld [vmem:[#allocation5 + $0xe58] sm:$0xff]
    %v509 = vld [vmem:[#allocation5 + $0xe60] sm:$0xff]
    %v510 = vld [vmem:[#allocation5 + $0xe68] sm:$0xff]
    %v511 = vld [vmem:[#allocation5 + $0xe70] sm:$0xff]
    %v512 = vld [vmem:[#allocation5 + $0xe78] sm:$0xff]
    %v513 = vld [vmem:[#allocation5 + $0xe80] sm:$0xff]
    %v514 = vld [vmem:[#allocation5 + $0xe88] sm:$0xff]
    %v515 = vld [vmem:[#allocation5 + $0xe90] sm:$0xff]
    %v516 = vld [vmem:[#allocation5 + $0xe98] sm:$0xff]
    %v517 = vld [vmem:[#allocation5 + $0xea0] sm:$0xff]
    %v518 = vld [vmem:[#allocation5 + $0xea8] sm:$0xff]
    %v519 = vld [vmem:[#allocation5 + $0xeb0] sm:$0xff]
    %v520 = vld [vmem:[#allocation5 + $0xeb8] sm:$0xff]
    %v521 = vld [vmem:[#allocation5 + $0xec0] sm:$0xff]
    %v522 = vld [vmem:[#allocation5 + $0xec8] sm:$0xff]
    %v523 = vld [vmem:[#allocation5 + $0xed0] sm:$0xff]
    %v524 = vld [vmem:[#allocation5 + $0xed8] sm:$0xff]
    %v525 = vld [vmem:[#allocation5 + $0xee0] sm:$0xff]
    %v526 = vld [vmem:[#allocation5 + $0xee8] sm:$0xff]
    %v527 = vld [vmem:[#allocation5 + $0xef0] sm:$0xff]
    %v528 = vld [vmem:[#allocation5 + $0xef8] sm:$0xff]
    %v529 = vld [vmem:[#allocation5 + $0xf00] sm:$0xff]
    %v530 = vld [vmem:[#allocation5 + $0xf08] sm:$0xff]
    %v531 = vld [vmem:[#allocation5 + $0xf10] sm:$0xff]
    %v532 = vld [vmem:[#allocation5 + $0xf18] sm:$0xff]
    %v533 = vld [vmem:[#allocation5 + $0xf20] sm:$0xff]
    %v534 = vld [vmem:[#allocation5 + $0xf28] sm:$0xff]
    %v535 = vld [vmem:[#allocation5 + $0xf30] sm:$0xff]
    %v536 = vld [vmem:[#allocation5 + $0xf38] sm:$0xff]
    %v537 = vld [vmem:[#allocation5 + $0xf40] sm:$0xff]
    %v538 = vld [vmem:[#allocation5 + $0xf48] sm:$0xff]
    %v539 = vld [vmem:[#allocation5 + $0xf50] sm:$0xff]
    %v540 = vld [vmem:[#allocation5 + $0xf58] sm:$0xff]
    %v541 = vld [vmem:[#allocation5 + $0xf60] sm:$0xff]
    %v542 = vld [vmem:[#allocation5 + $0xf68] sm:$0xff]
    %v543 = vld [vmem:[#allocation5 + $0xf70] sm:$0xff]
    %v544 = vld [vmem:[#allocation5 + $0xf78] sm:$0xff]
    %v545 = vld [vmem:[#allocation5 + $0xf80] sm:$0xff]
    %v546 = vld [vmem:[#allocation5 + $0xf88] sm:$0xff]
    %v547 = vld [vmem:[#allocation5 + $0xf90] sm:$0xff]
    %v548 = vld [vmem:[#allocation5 + $0xf98] sm:$0xff]
    %v549 = vld [vmem:[#allocation5 + $0xfa0] sm:$0xff]
    %v550 = vld [vmem:[#allocation5 + $0xfa8] sm:$0xff]
    %v551 = vld [vmem:[#allocation5 + $0xfb0] sm:$0xff]
    %v552 = vld [vmem:[#allocation5 + $0xfb8] sm:$0xff]
    %v553 = vld [vmem:[#allocation5 + $0xfc0] sm:$0xff]
    %v554 = vld [vmem:[#allocation5 + $0xfc8] sm:$0xff]
    %v555 = vld [vmem:[#allocation5 + $0xfd0] sm:$0xff]
    %v556 = vld [vmem:[#allocation5 + $0xfd8] sm:$0xff]
    %v557 = vld [vmem:[#allocation5 + $0xfe0] sm:$0xff]
    %v558 = vld [vmem:[#allocation5 + $0xfe8] sm:$0xff]
    %v559 = vld [vmem:[#allocation5 + $0xff0] sm:$0xff]
    %v560 = vld [vmem:[#allocation5 + $0xff8] sm:$0xff]
    %561 = vmatprep.subr.mxu0 %v50
    %562 = vmatpush1.msra.mxu0 %v49
    %563 = vmatprep.subr.mxu0 %v66
    %564 = vmatpush1.msra.mxu0 %v65
    %565 = vmatprep.subr.mxu0 %v82
    %566 = vmatpush1.msra.mxu0 %v81
    %567 = vmatprep.subr.mxu0 %v98
    %568 = vmatpush1.msra.mxu0 %v97
    %569 = vmatprep.subr.mxu0 %v114
    %570 = vmatpush1.msra.mxu0 %v113
    %571 = vmatprep.subr.mxu0 %v130
    %572 = vmatpush1.msra.mxu0 %v129
    %573 = vmatprep.subr.mxu0 %v146
    %574 = vmatpush1.msra.mxu0 %v145
    %575 = vmatprep.subr.mxu0 %v162
    %576 = vmatpush1.msra.mxu0 %v161
    %577 = vmatprep.subr.mxu0 %v178
    %578 = vmatpush1.msra.mxu0 %v177
    %579 = vmatprep.subr.mxu0 %v194
    %580 = vmatpush1.msra.mxu0 %v193
    %581 = vmatprep.subr.mxu0 %v210
    %582 = vmatpush1.msra.mxu0 %v209
    %583 = vmatprep.subr.mxu0 %v226
    %584 = vmatpush1.msra.mxu0 %v225
    %585 = vmatprep.subr.mxu0 %v242
    %586 = vmatpush1.msra.mxu0 %v241
    %587 = vmatprep.subr.mxu0 %v258
    %588 = vmatpush1.msra.mxu0 %v257
    %589 = vmatprep.subr.mxu0 %v274
    %590 = vmatpush1.msra.mxu0 %v273
    %591 = vmatprep.subr.mxu0 %v290
    %592 = vmatpush1.msra.mxu0 %v289
    %593 = vmatprep.subr.mxu0 %v306
    %594 = vmatpush1.msra.mxu0 %v305
    %595 = vmatprep.subr.mxu0 %v322
    %596 = vmatpush1.msra.mxu0 %v321
    %597 = vmatprep.subr.mxu0 %v338
    %598 = vmatpush1.msra.mxu0 %v337
    %599 = vmatprep.subr.mxu0 %v354
    %600 = vmatpush1.msra.mxu0 %v353
    %601 = vmatprep.subr.mxu0 %v370
    %602 = vmatpush1.msra.mxu0 %v369
    %603 = vmatprep.subr.mxu0 %v386
    %604 = vmatpush1.msra.mxu0 %v385
    %605 = vmatprep.subr.mxu0 %v402
    %606 = vmatpush1.msra.mxu0 %v401
    %607 = vmatprep.subr.mxu0 %v418
    %608 = vmatpush1.msra.mxu0 %v417
    %609 = vmatprep.subr.mxu0 %v434
    %610 = vmatpush1.msra.mxu0 %v433
    %611 = vmatprep.subr.mxu0 %v450
    %612 = vmatpush1.msra.mxu0 %v449
    %613 = vmatprep.subr.mxu0 %v466
    %614 = vmatpush1.msra.mxu0 %v465
    %615 = vmatprep.subr.mxu0 %v482
    %616 = vmatpush1.msra.mxu0 %v481
    %617 = vmatprep.subr.mxu0 %v498
    %618 = vmatpush1.msra.mxu0 %v497
    %619 = vmatprep.subr.mxu0 %v514
    %620 = vmatpush1.msra.mxu0 %v513
    %621 = vmatprep.subr.mxu0 %v530
    %622 = vmatpush1.msra.mxu0 %v529
    %623 = vmatprep.subr.mxu0 %v546
    %624 = vmatpush1.msra.mxu0 %v545
    %625 = vmatprep.mubr.f32.mxu0 %v46
    %626 = vmatmul.mubr.f32.gmra.mrb[0].mxu0 %v45
    %v627 = vpop.f32.mrb[0].mxu0
    %v628 = vadd.f32 0.0, %v627
    %v629 = vpop.f32.mrb[0].mxu0
    %v630 = vadd.f32 0.0, %v629
    %631 = vmatprep.mubr.f32.mxu0 %v48
    %632 = vmatmul.mubr.f32.gmra.mrb[0].mxu0 %v47
    %v633 = vpop.f32.mrb[0].mxu0
    %v634 = vadd.f32 0.0, %v633
    %v635 = vpop.f32.mrb[0].mxu0
    %v636 = vadd.f32 0.0, %v635
    %637 = vdwg.mxu0
    %638 = vmatprep.subr.mxu0 %v52
    %639 = vmatpush1.msra.mxu0 %v51
    %640 = vmatprep.subr.mxu0 %v68
    %641 = vmatpush1.msra.mxu0 %v67
    %642 = vmatprep.subr.mxu0 %v84
    %643 = vmatpush1.msra.mxu0 %v83
    %644 = vmatprep.subr.mxu0 %v100
    %645 = vmatpush1.msra.mxu0 %v99
    %646 = vmatprep.subr.mxu0 %v116
    %647 = vmatpush1.msra.mxu0 %v115
    %648 = vmatprep.subr.mxu0 %v132
    %649 = vmatpush1.msra.mxu0 %v131
    %650 = vmatprep.subr.mxu0 %v148
    %651 = vmatpush1.msra.mxu0 %v147
    %652 = vmatprep.subr.mxu0 %v164
    %653 = vmatpush1.msra.mxu0 %v163
    %654 = vmatprep.subr.mxu0 %v180
    %655 = vmatpush1.msra.mxu0 %v179
    %656 = vmatprep.subr.mxu0 %v196
    %657 = vmatpush1.msra.mxu0 %v195
    %658 = vmatprep.subr.mxu0 %v212
    %659 = vmatpush1.msra.mxu0 %v211
    %660 = vmatprep.subr.mxu0 %v228
    %661 = vmatpush1.msra.mxu0 %v227
    %662 = vmatprep.subr.mxu0 %v244
    %663 = vmatpush1.msra.mxu0 %v243
    %664 = vmatprep.subr.mxu0 %v260
    %665 = vmatpush1.msra.mxu0 %v259
    %666 = vmatprep.subr.mxu0 %v276
    %667 = vmatpush1.msra.mxu0 %v275
    %668 = vmatprep.subr.mxu0 %v292
    %669 = vmatpush1.msra.mxu0 %v291
    %670 = vmatprep.subr.mxu0 %v308
    %671 = vmatpush1.msra.mxu0 %v307
    %672 = vmatprep.subr.mxu0 %v324
    %673 = vmatpush1.msra.mxu0 %v323
    %674 = vmatprep.subr.mxu0 %v340
    %675 = vmatpush1.msra.mxu0 %v339
    %676 = vmatprep.subr.mxu0 %v356
    %677 = vmatpush1.msra.mxu0 %v355
    %678 = vmatprep.subr.mxu0 %v372
    %679 = vmatpush1.msra.mxu0 %v371
    %680 = vmatprep.subr.mxu0 %v388
    %681 = vmatpush1.msra.mxu0 %v387
    %682 = vmatprep.subr.mxu0 %v404
    %683 = vmatpush1.msra.mxu0 %v403
    %684 = vmatprep.subr.mxu0 %v420
    %685 = vmatpush1.msra.mxu0 %v419
    %686 = vmatprep.subr.mxu0 %v436
    %687 = vmatpush1.msra.mxu0 %v435
    %688 = vmatprep.subr.mxu0 %v452
    %689 = vmatpush1.msra.mxu0 %v451
    %690 = vmatprep.subr.mxu0 %v468
    %691 = vmatpush1.msra.mxu0 %v467
    %692 = vmatprep.subr.mxu0 %v484
    %693 = vmatpush1.msra.mxu0 %v483
    %694 = vmatprep.subr.mxu0 %v500
    %695 = vmatpush1.msra.mxu0 %v499
    %696 = vmatprep.subr.mxu0 %v516
    %697 = vmatpush1.msra.mxu0 %v515
    %698 = vmatprep.subr.mxu0 %v532
    %699 = vmatpush1.msra.mxu0 %v531
    %700 = vmatprep.subr.mxu0 %v548
    %701 = vmatpush1.msra.mxu0 %v547
    %702 = vmatprep.mubr.f32.mxu0 %v46
    %703 = vmatmul.mubr.f32.gmra.mrb[0].mxu0 %v45
    %v704 = vpop.f32.mrb[0].mxu0
    %v705 = vadd.f32 0.0, %v704
    %v706 = vpop.f32.mrb[0].mxu0
    %v707 = vadd.f32 0.0, %v706
    %708 = vmatprep.mubr.f32.mxu0 %v48
    %709 = vmatmul.mubr.f32.gmra.mrb[0].mxu0 %v47
    %v710 = vpop.f32.mrb[0].mxu0
    %v711 = vadd.f32 0.0, %v710
    %v712 = vpop.f32.mrb[0].mxu0
    %v713 = vadd.f32 0.0, %v712
    %714 = vdwg.mxu0
    %715 = vmatprep.subr.mxu0 %v54
    %716 = vmatpush1.msra.mxu0 %v53
    %717 = vmatprep.subr.mxu0 %v70
    %718 = vmatpush1.msra.mxu0 %v69
    %719 = vmatprep.subr.mxu0 %v86
    %720 = vmatpush1.msra.mxu0 %v85
    %721 = vmatprep.subr.mxu0 %v102
    %722 = vmatpush1.msra.mxu0 %v101
    %723 = vmatprep.subr.mxu0 %v118
    %724 = vmatpush1.msra.mxu0 %v117
    %725 = vmatprep.subr.mxu0 %v134
    %726 = vmatpush1.msra.mxu0 %v133
    %727 = vmatprep.subr.mxu0 %v150
    %728 = vmatpush1.msra.mxu0 %v149
    %729 = vmatprep.subr.mxu0 %v166
    %730 = vmatpush1.msra.mxu0 %v165
    %731 = vmatprep.subr.mxu0 %v182
    %732 = vmatpush1.msra.mxu0 %v181
    %733 = vmatprep.subr.mxu0 %v198
    %734 = vmatpush1.msra.mxu0 %v197
    %735 = vmatprep.subr.mxu0 %v214
    %736 = vmatpush1.msra.mxu0 %v213
    %737 = vmatprep.subr.mxu0 %v230
    %738 = vmatpush1.msra.mxu0 %v229
    %739 = vmatprep.subr.mxu0 %v246
    %740 = vmatpush1.msra.mxu0 %v245
    %741 = vmatprep.subr.mxu0 %v262
    %742 = vmatpush1.msra.mxu0 %v261
    %743 = vmatprep.subr.mxu0 %v278
    %744 = vmatpush1.msra.mxu0 %v277
    %745 = vmatprep.subr.mxu0 %v294
    %746 = vmatpush1.msra.mxu0 %v293
    %747 = vmatprep.subr.mxu0 %v310
    %748 = vmatpush1.msra.mxu0 %v309
    %749 = vmatprep.subr.mxu0 %v326
    %750 = vmatpush1.msra.mxu0 %v325
    %751 = vmatprep.subr.mxu0 %v342
    %752 = vmatpush1.msra.mxu0 %v341
    %753 = vmatprep.subr.mxu0 %v358
    %754 = vmatpush1.msra.mxu0 %v357
    %755 = vmatprep.subr.mxu0 %v374
    %756 = vmatpush1.msra.mxu0 %v373
    %757 = vmatprep.subr.mxu0 %v390
    %758 = vmatpush1.msra.mxu0 %v389
    %759 = vmatprep.subr.mxu0 %v406
    %760 = vmatpush1.msra.mxu0 %v405
    %761 = vmatprep.subr.mxu0 %v422
    %762 = vmatpush1.msra.mxu0 %v421
    %763 = vmatprep.subr.mxu0 %v438
    %764 = vmatpush1.msra.mxu0 %v437
    %765 = vmatprep.subr.mxu0 %v454
    %766 = vmatpush1.msra.mxu0 %v453
    %767 = vmatprep.subr.mxu0 %v470
    %768 = vmatpush1.msra.mxu0 %v469
    %769 = vmatprep.subr.mxu0 %v486
    %770 = vmatpush1.msra.mxu0 %v485
    %771 = vmatprep.subr.mxu0 %v502
    %772 = vmatpush1.msra.mxu0 %v501
    %773 = vmatprep.subr.mxu0 %v518
    %774 = vmatpush1.msra.mxu0 %v517
    %775 = vmatprep.subr.mxu0 %v534
    %776 = vmatpush1.msra.mxu0 %v533
    %777 = vmatprep.subr.mxu0 %v550
    %778 = vmatpush1.msra.mxu0 %v549
    %779 = vmatprep.mubr.f32.mxu0 %v46
    %780 = vmatmul.mubr.f32.gmra.mrb[0].mxu0 %v45
    %v781 = vpop.f32.mrb[0].mxu0
    %v782 = vadd.f32 0.0, %v781
    %v783 = vpop.f32.mrb[0].mxu0
    %v784 = vadd.f32 0.0, %v783
    %785 = vmatprep.mubr.f32.mxu0 %v48
    %786 = vmatmul.mubr.f32.gmra.mrb[0].mxu0 %v47
    %v787 = vpop.f32.mrb[0].mxu0
    %v788 = vadd.f32 0.0, %v787
    %v789 = vpop.f32.mrb[0].mxu0
    %v790 = vadd.f32 0.0, %v789
    %791 = vdwg.mxu0
    %792 = vmatprep.subr.mxu0 %v56
    %793 = vmatpush1.msra.mxu0 %v55
    %794 = vmatprep.subr.mxu0 %v72
    %795 = vmatpush1.msra.mxu0 %v71
    %796 = vmatprep.subr.mxu0 %v88
    %797 = vmatpush1.msra.mxu0 %v87
    %798 = vmatprep.subr.mxu0 %v104
    %799 = vmatpush1.msra.mxu0 %v103
    %800 = vmatprep.subr.mxu0 %v120
    %801 = vmatpush1.msra.mxu0 %v119
    %802 = vmatprep.subr.mxu0 %v136
    %803 = vmatpush1.msra.mxu0 %v135
    %804 = vmatprep.subr.mxu0 %v152
    %805 = vmatpush1.msra.mxu0 %v151
    %806 = vmatprep.subr.mxu0 %v168
    %807 = vmatpush1.msra.mxu0 %v167
    %808 = vmatprep.subr.mxu0 %v184
    %809 = vmatpush1.msra.mxu0 %v183
    %810 = vmatprep.subr.mxu0 %v200
    %811 = vmatpush1.msra.mxu0 %v199
    %812 = vmatprep.subr.mxu0 %v216
    %813 = vmatpush1.msra.mxu0 %v215
    %814 = vmatprep.subr.mxu0 %v232
    %815 = vmatpush1.msra.mxu0 %v231
    %816 = vmatprep.subr.mxu0 %v248
    %817 = vmatpush1.msra.mxu0 %v247
    %818 = vmatprep.subr.mxu0 %v264
    %819 = vmatpush1.msra.mxu0 %v263
    %820 = vmatprep.subr.mxu0 %v280
    %821 = vmatpush1.msra.mxu0 %v279
    %822 = vmatprep.subr.mxu0 %v296
    %823 = vmatpush1.msra.mxu0 %v295
    %824 = vmatprep.subr.mxu0 %v312
    %825 = vmatpush1.msra.mxu0 %v311
    %826 = vmatprep.subr.mxu0 %v328
    %827 = vmatpush1.msra.mxu0 %v327
    %828 = vmatprep.subr.mxu0 %v344
    %829 = vmatpush1.msra.mxu0 %v343
    %830 = vmatprep.subr.mxu0 %v360
    %831 = vmatpush1.msra.mxu0 %v359
    %832 = vmatprep.subr.mxu0 %v376
    %833 = vmatpush1.msra.mxu0 %v375
    %834 = vmatprep.subr.mxu0 %v392
    %835 = vmatpush1.msra.mxu0 %v391
    %836 = vmatprep.subr.mxu0 %v408
    %837 = vmatpush1.msra.mxu0 %v407
    %838 = vmatprep.subr.mxu0 %v424
    %839 = vmatpush1.msra.mxu0 %v423
    %840 = vmatprep.subr.mxu0 %v440
    %841 = vmatpush1.msra.mxu0 %v439
    %842 = vmatprep.subr.mxu0 %v456
    %843 = vmatpush1.msra.mxu0 %v455
    %844 = vmatprep.subr.mxu0 %v472
    %845 = vmatpush1.msra.mxu0 %v471
    %846 = vmatprep.subr.mxu0 %v488
    %847 = vmatpush1.msra.mxu0 %v487
    %848 = vmatprep.subr.mxu0 %v504
    %849 = vmatpush1.msra.mxu0 %v503
    %850 = vmatprep.subr.mxu0 %v520
    %851 = vmatpush1.msra.mxu0 %v519
    %852 = vmatprep.subr.mxu0 %v536
    %853 = vmatpush1.msra.mxu0 %v535
    %854 = vmatprep.subr.mxu0 %v552
    %855 = vmatpush1.msra.mxu0 %v551
    %856 = vmatprep.mubr.f32.mxu0 %v46
    %857 = vmatmul.mubr.f32.gmra.mrb[0].mxu0 %v45
    %v858 = vpop.f32.mrb[0].mxu0
    %v859 = vadd.f32 0.0, %v858
    %v860 = vpop.f32.mrb[0].mxu0
    %v861 = vadd.f32 0.0, %v860
    %862 = vmatprep.mubr.f32.mxu0 %v48
    %863 = vmatmul.mubr.f32.gmra.mrb[0].mxu0 %v47
    %v864 = vpop.f32.mrb[0].mxu0
    %v865 = vadd.f32 0.0, %v864
    %v866 = vpop.f32.mrb[0].mxu0
    %v867 = vadd.f32 0.0, %v866
    %868 = vdwg.mxu0
    %869 = vmatprep.subr.mxu0 %v58
    %870 = vmatpush1.msra.mxu0 %v57
    %871 = vmatprep.subr.mxu0 %v74
    %872 = vmatpush1.msra.mxu0 %v73
    %873 = vmatprep.subr.mxu0 %v90
    %874 = vmatpush1.msra.mxu0 %v89
    %875 = vmatprep.subr.mxu0 %v106
    %876 = vmatpush1.msra.mxu0 %v105
    %877 = vmatprep.subr.mxu0 %v122
    %878 = vmatpush1.msra.mxu0 %v121
    %879 = vmatprep.subr.mxu0 %v138
    %880 = vmatpush1.msra.mxu0 %v137
    %881 = vmatprep.subr.mxu0 %v154
    %882 = vmatpush1.msra.mxu0 %v153
    %883 = vmatprep.subr.mxu0 %v170
    %884 = vmatpush1.msra.mxu0 %v169
    %885 = vmatprep.subr.mxu0 %v186
    %886 = vmatpush1.msra.mxu0 %v185
    %887 = vmatprep.subr.mxu0 %v202
    %888 = vmatpush1.msra.mxu0 %v201
    %889 = vmatprep.subr.mxu0 %v218
    %890 = vmatpush1.msra.mxu0 %v217
    %891 = vmatprep.subr.mxu0 %v234
    %892 = vmatpush1.msra.mxu0 %v233
    %893 = vmatprep.subr.mxu0 %v250
    %894 = vmatpush1.msra.mxu0 %v249
    %895 = vmatprep.subr.mxu0 %v266
    %896 = vmatpush1.msra.mxu0 %v265
    %897 = vmatprep.subr.mxu0 %v282
    %898 = vmatpush1.msra.mxu0 %v281
    %899 = vmatprep.subr.mxu0 %v298
    %900 = vmatpush1.msra.mxu0 %v297
    %901 = vmatprep.subr.mxu0 %v314
    %902 = vmatpush1.msra.mxu0 %v313
    %903 = vmatprep.subr.mxu0 %v330
    %904 = vmatpush1.msra.mxu0 %v329
    %905 = vmatprep.subr.mxu0 %v346
    %906 = vmatpush1.msra.mxu0 %v345
    %907 = vmatprep.subr.mxu0 %v362
    %908 = vmatpush1.msra.mxu0 %v361
    %909 = vmatprep.subr.mxu0 %v378
    %910 = vmatpush1.msra.mxu0 %v377
    %911 = vmatprep.subr.mxu0 %v394
    %912 = vmatpush1.msra.mxu0 %v393
    %913 = vmatprep.subr.mxu0 %v410
    %914 = vmatpush1.msra.mxu0 %v409
    %915 = vmatprep.subr.mxu0 %v426
    %916 = vmatpush1.msra.mxu0 %v425
    %917 = vmatprep.subr.mxu0 %v442
    %918 = vmatpush1.msra.mxu0 %v441
    %919 = vmatprep.subr.mxu0 %v458
    %920 = vmatpush1.msra.mxu0 %v457
    %921 = vmatprep.subr.mxu0 %v474
    %922 = vmatpush1.msra.mxu0 %v473
    %923 = vmatprep.subr.mxu0 %v490
    %924 = vmatpush1.msra.mxu0 %v489
    %925 = vmatprep.subr.mxu0 %v506
    %926 = vmatpush1.msra.mxu0 %v505
    %927 = vmatprep.subr.mxu0 %v522
    %928 = vmatpush1.msra.mxu0 %v521
    %929 = vmatprep.subr.mxu0 %v538
    %930 = vmatpush1.msra.mxu0 %v537
    %931 = vmatprep.subr.mxu0 %v554
    %932 = vmatpush1.msra.mxu0 %v553
    %933 = vmatprep.mubr.f32.mxu0 %v46
    %934 = vmatmul.mubr.f32.gmra.mrb[0].mxu0 %v45
    %v935 = vpop.f32.mrb[0].mxu0
    %v936 = vadd.f32 0.0, %v935
    %v937 = vpop.f32.mrb[0].mxu0
    %v938 = vadd.f32 0.0, %v937
    %939 = vmatprep.mubr.f32.mxu0 %v48
    %940 = vmatmul.mubr.f32.gmra.mrb[0].mxu0 %v47
    %v941 = vpop.f32.mrb[0].mxu0
    %v942 = vadd.f32 0.0, %v941
    %v943 = vpop.f32.mrb[0].mxu0
    %v944 = vadd.f32 0.0, %v943
    %945 = vdwg.mxu0
    %946 = vmatprep.subr.mxu0 %v60
    %947 = vmatpush1.msra.mxu0 %v59
    %948 = vmatprep.subr.mxu0 %v76
    %949 = vmatpush1.msra.mxu0 %v75
    %950 = vmatprep.subr.mxu0 %v92
    %951 = vmatpush1.msra.mxu0 %v91
    %952 = vmatprep.subr.mxu0 %v108
    %953 = vmatpush1.msra.mxu0 %v107
    %954 = vmatprep.subr.mxu0 %v124
    %955 = vmatpush1.msra.mxu0 %v123
    %956 = vmatprep.subr.mxu0 %v140
    %957 = vmatpush1.msra.mxu0 %v139
    %958 = vmatprep.subr.mxu0 %v156
    %959 = vmatpush1.msra.mxu0 %v155
    %960 = vmatprep.subr.mxu0 %v172
    %961 = vmatpush1.msra.mxu0 %v171
    %962 = vmatprep.subr.mxu0 %v188
    %963 = vmatpush1.msra.mxu0 %v187
    %964 = vmatprep.subr.mxu0 %v204
    %965 = vmatpush1.msra.mxu0 %v203
    %966 = vmatprep.subr.mxu0 %v220
    %967 = vmatpush1.msra.mxu0 %v219
    %968 = vmatprep.subr.mxu0 %v236
    %969 = vmatpush1.msra.mxu0 %v235
    %970 = vmatprep.subr.mxu0 %v252
    %971 = vmatpush1.msra.mxu0 %v251
    %972 = vmatprep.subr.mxu0 %v268
    %973 = vmatpush1.msra.mxu0 %v267
    %974 = vmatprep.subr.mxu0 %v284
    %975 = vmatpush1.msra.mxu0 %v283
    %976 = vmatprep.subr.mxu0 %v300
    %977 = vmatpush1.msra.mxu0 %v299
    %978 = vmatprep.subr.mxu0 %v316
    %979 = vmatpush1.msra.mxu0 %v315
    %980 = vmatprep.subr.mxu0 %v332
    %981 = vmatpush1.msra.mxu0 %v331
    %982 = vmatprep.subr.mxu0 %v348
    %983 = vmatpush1.msra.mxu0 %v347
    %984 = vmatprep.subr.mxu0 %v364
    %985 = vmatpush1.msra.mxu0 %v363
    %986 = vmatprep.subr.mxu0 %v380
    %987 = vmatpush1.msra.mxu0 %v379
    %988 = vmatprep.subr.mxu0 %v396
    %989 = vmatpush1.msra.mxu0 %v395
    %990 = vmatprep.subr.mxu0 %v412
    %991 = vmatpush1.msra.mxu0 %v411
    %992 = vmatprep.subr.mxu0 %v428
    %993 = vmatpush1.msra.mxu0 %v427
    %994 = vmatprep.subr.mxu0 %v444
    %995 = vmatpush1.msra.mxu0 %v443
    %996 = vmatprep.subr.mxu0 %v460
    %997 = vmatpush1.msra.mxu0 %v459
    %998 = vmatprep.subr.mxu0 %v476
    %999 = vmatpush1.msra.mxu0 %v475
    %1000 = vmatprep.subr.mxu0 %v492
    %1001 = vmatpush1.msra.mxu0 %v491
    %1002 = vmatprep.subr.mxu0 %v508
    %1003 = vmatpush1.msra.mxu0 %v507
    %1004 = vmatprep.subr.mxu0 %v524
    %1005 = vmatpush1.msra.mxu0 %v523
    %1006 = vmatprep.subr.mxu0 %v540
    %1007 = vmatpush1.msra.mxu0 %v539
    %1008 = vmatprep.subr.mxu0 %v556
    %1009 = vmatpush1.msra.mxu0 %v555
    %1010 = vmatprep.mubr.f32.mxu0 %v46
    %1011 = vmatmul.mubr.f32.gmra.mrb[0].mxu0 %v45
    %v1012 = vpop.f32.mrb[0].mxu0
    %v1013 = vadd.f32 0.0, %v1012
    %v1014 = vpop.f32.mrb[0].mxu0
    %v1015 = vadd.f32 0.0, %v1014
    %1016 = vmatprep.mubr.f32.mxu0 %v48
    %1017 = vmatmul.mubr.f32.gmra.mrb[0].mxu0 %v47
    %v1018 = vpop.f32.mrb[0].mxu0
    %v1019 = vadd.f32 0.0, %v1018
    %v1020 = vpop.f32.mrb[0].mxu0
    %v1021 = vadd.f32 0.0, %v1020
    %1022 = vdwg.mxu0
    %1023 = vmatprep.subr.mxu0 %v62
    %1024 = vmatpush1.msra.mxu0 %v61
    %1025 = vmatprep.subr.mxu0 %v78
    %1026 = vmatpush1.msra.mxu0 %v77
    %1027 = vmatprep.subr.mxu0 %v94
    %1028 = vmatpush1.msra.mxu0 %v93
    %1029 = vmatprep.subr.mxu0 %v110
    %1030 = vmatpush1.msra.mxu0 %v109
    %1031 = vmatprep.subr.mxu0 %v126
    %1032 = vmatpush1.msra.mxu0 %v125
    %1033 = vmatprep.subr.mxu0 %v142
    %1034 = vmatpush1.msra.mxu0 %v141
    %1035 = vmatprep.subr.mxu0 %v158
    %1036 = vmatpush1.msra.mxu0 %v157
    %1037 = vmatprep.subr.mxu0 %v174
    %1038 = vmatpush1.msra.mxu0 %v173
    %1039 = vmatprep.subr.mxu0 %v190
    %1040 = vmatpush1.msra.mxu0 %v189
    %1041 = vmatprep.subr.mxu0 %v206
    %1042 = vmatpush1.msra.mxu0 %v205
    %1043 = vmatprep.subr.mxu0 %v222
    %1044 = vmatpush1.msra.mxu0 %v221
    %1045 = vmatprep.subr.mxu0 %v238
    %1046 = vmatpush1.msra.mxu0 %v237
    %1047 = vmatprep.subr.mxu0 %v254
    %1048 = vmatpush1.msra.mxu0 %v253
    %1049 = vmatprep.subr.mxu0 %v270
    %1050 = vmatpush1.msra.mxu0 %v269
    %1051 = vmatprep.subr.mxu0 %v286
    %1052 = vmatpush1.msra.mxu0 %v285
    %1053 = vmatprep.subr.mxu0 %v302
    %1054 = vmatpush1.msra.mxu0 %v301
    %1055 = vmatprep.subr.mxu0 %v318
    %1056 = vmatpush1.msra.mxu0 %v317
    %1057 = vmatprep.subr.mxu0 %v334
    %1058 = vmatpush1.msra.mxu0 %v333
    %1059 = vmatprep.subr.mxu0 %v350
    %1060 = vmatpush1.msra.mxu0 %v349
    %1061 = vmatprep.subr.mxu0 %v366
    %1062 = vmatpush1.msra.mxu0 %v365
    %1063 = vmatprep.subr.mxu0 %v382
    %1064 = vmatpush1.msra.mxu0 %v381
    %1065 = vmatprep.subr.mxu0 %v398
    %1066 = vmatpush1.msra.mxu0 %v397
    %1067 = vmatprep.subr.mxu0 %v414
    %1068 = vmatpush1.msra.mxu0 %v413
    %1069 = vmatprep.subr.mxu0 %v430
    %1070 = vmatpush1.msra.mxu0 %v429
    %1071 = vmatprep.subr.mxu0 %v446
    %1072 = vmatpush1.msra.mxu0 %v445
    %1073 = vmatprep.subr.mxu0 %v462
    %1074 = vmatpush1.msra.mxu0 %v461
    %1075 = vmatprep.subr.mxu0 %v478
    %1076 = vmatpush1.msra.mxu0 %v477
    %1077 = vmatprep.subr.mxu0 %v494
    %1078 = vmatpush1.msra.mxu0 %v493
    %1079 = vmatprep.subr.mxu0 %v510
    %1080 = vmatpush1.msra.mxu0 %v509
    %1081 = vmatprep.subr.mxu0 %v526
    %1082 = vmatpush1.msra.mxu0 %v525
    %1083 = vmatprep.subr.mxu0 %v542
    %1084 = vmatpush1.msra.mxu0 %v541
    %1085 = vmatprep.subr.mxu0 %v558
    %1086 = vmatpush1.msra.mxu0 %v557
    %1087 = vmatprep.mubr.f32.mxu0 %v46
    %1088 = vmatmul.mubr.f32.gmra.mrb[0].mxu0 %v45
    %v1089 = vpop.f32.mrb[0].mxu0
    %v1090 = vadd.f32 0.0, %v1089
    %v1091 = vpop.f32.mrb[0].mxu0
    %v1092 = vadd.f32 0.0, %v1091
    %1093 = vmatprep.mubr.f32.mxu0 %v48
    %1094 = vmatmul.mubr.f32.gmra.mrb[0].mxu0 %v47
    %v1095 = vpop.f32.mrb[0].mxu0
    %v1096 = vadd.f32 0.0, %v1095
    %v1097 = vpop.f32.mrb[0].mxu0
    %v1098 = vadd.f32 0.0, %v1097
    %1099 = vdwg.mxu0
    %1100 = vmatprep.subr.mxu0 %v64
    %1101 = vmatpush1.msra.mxu0 %v63
    %1102 = vmatprep.subr.mxu0 %v80
    %1103 = vmatpush1.msra.mxu0 %v79
    %1104 = vmatprep.subr.mxu0 %v96
    %1105 = vmatpush1.msra.mxu0 %v95
    %1106 = vmatprep.subr.mxu0 %v112
    %1107 = vmatpush1.msra.mxu0 %v111
    %1108 = vmatprep.subr.mxu0 %v128
    %1109 = vmatpush1.msra.mxu0 %v127
    %1110 = vmatprep.subr.mxu0 %v144
    %1111 = vmatpush1.msra.mxu0 %v143
    %1112 = vmatprep.subr.mxu0 %v160
    %1113 = vmatpush1.msra.mxu0 %v159
    %1114 = vmatprep.subr.mxu0 %v176
    %1115 = vmatpush1.msra.mxu0 %v175
    %1116 = vmatprep.subr.mxu0 %v192
    %1117 = vmatpush1.msra.mxu0 %v191
    %1118 = vmatprep.subr.mxu0 %v208
    %1119 = vmatpush1.msra.mxu0 %v207
    %1120 = vmatprep.subr.mxu0 %v224
    %1121 = vmatpush1.msra.mxu0 %v223
    %1122 = vmatprep.subr.mxu0 %v240
    %1123 = vmatpush1.msra.mxu0 %v239
    %1124 = vmatprep.subr.mxu0 %v256
    %1125 = vmatpush1.msra.mxu0 %v255
    %1126 = vmatprep.subr.mxu0 %v272
    %1127 = vmatpush1.msra.mxu0 %v271
    %1128 = vmatprep.subr.mxu0 %v288
    %1129 = vmatpush1.msra.mxu0 %v287
    %1130 = vmatprep.subr.mxu0 %v304
    %1131 = vmatpush1.msra.mxu0 %v303
    %1132 = vmatprep.subr.mxu0 %v320
    %1133 = vmatpush1.msra.mxu0 %v319
    %1134 = vmatprep.subr.mxu0 %v336
    %1135 = vmatpush1.msra.mxu0 %v335
    %1136 = vmatprep.subr.mxu0 %v352
    %1137 = vmatpush1.msra.mxu0 %v351
    %1138 = vmatprep.subr.mxu0 %v368
    %1139 = vmatpush1.msra.mxu0 %v367
    %1140 = vmatprep.subr.mxu0 %v384
    %1141 = vmatpush1.msra.mxu0 %v383
    %1142 = vmatprep.subr.mxu0 %v400
    %1143 = vmatpush1.msra.mxu0 %v399
    %1144 = vmatprep.subr.mxu0 %v416
    %1145 = vmatpush1.msra.mxu0 %v415
    %1146 = vmatprep.subr.mxu0 %v432
    %1147 = vmatpush1.msra.mxu0 %v431
    %1148 = vmatprep.subr.mxu0 %v448
    %1149 = vmatpush1.msra.mxu0 %v447
    %1150 = vmatprep.subr.mxu0 %v464
    %1151 = vmatpush1.msra.mxu0 %v463
    %1152 = vmatprep.subr.mxu0 %v480
    %1153 = vmatpush1.msra.mxu0 %v479
    %1154 = vmatprep.subr.mxu0 %v496
    %1155 = vmatpush1.msra.mxu0 %v495
    %1156 = vmatprep.subr.mxu0 %v512
    %1157 = vmatpush1.msra.mxu0 %v511
    %1158 = vmatprep.subr.mxu0 %v528
    %1159 = vmatpush1.msra.mxu0 %v527
    %1160 = vmatprep.subr.mxu0 %v544
    %1161 = vmatpush1.msra.mxu0 %v543
    %1162 = vmatprep.subr.mxu0 %v560
    %1163 = vmatpush1.msra.mxu0 %v559
    %1164 = vmatprep.mubr.f32.mxu0 %v46
    %1165 = vmatmul.mubr.f32.gmra.mrb[0].mxu0 %v45
    %v1166 = vpop.f32.mrb[0].mxu0
    %v1167 = vadd.f32 0.0, %v1166
    %v1168 = vpop.f32.mrb[0].mxu0
    %v1169 = vadd.f32 0.0, %v1168
    %1170 = vmatprep.mubr.f32.mxu0 %v48
    %1171 = vmatmul.mubr.f32.gmra.mrb[0].mxu0 %v47
    %v1172 = vpop.f32.mrb[0].mxu0
    %v1173 = vadd.f32 0.0, %v1172
    %v1174 = vpop.f32.mrb[0].mxu0
    %v1175 = vadd.f32 0.0, %v1174
    %1176 = vdwg.mxu0
    %1177 = vst [vmem:[#allocation7] sm:$0xff] %v628
    %1178 = vst [vmem:[#allocation7 + $0x8] sm:$0xff] %v630
    %1179 = vst [vmem:[#allocation7 + $0x10] sm:$0xff] %v705
    %1180 = vst [vmem:[#allocation7 + $0x18] sm:$0xff] %v707
    %1181 = vst [vmem:[#allocation7 + $0x20] sm:$0xff] %v782
    %1182 = vst [vmem:[#allocation7 + $0x28] sm:$0xff] %v784
    %1183 = vst [vmem:[#allocation7 + $0x30] sm:$0xff] %v859
    %1184 = vst [vmem:[#allocation7 + $0x38] sm:$0xff] %v861
    %1185 = vst [vmem:[#allocation7 + $0x40] sm:$0xff] %v936
    %1186 = vst [vmem:[#allocation7 + $0x48] sm:$0xff] %v938
    %1187 = vst [vmem:[#allocation7 + $0x50] sm:$0xff] %v1013
    %1188 = vst [vmem:[#allocation7 + $0x58] sm:$0xff] %v1015
    %1189 = vst [vmem:[#allocation7 + $0x60] sm:$0xff] %v1090
    %1190 = vst [vmem:[#allocation7 + $0x68] sm:$0xff] %v1092
    %1191 = vst [vmem:[#allocation7 + $0x70] sm:$0xff] %v1167
    %1192 = vst [vmem:[#allocation7 + $0x78] sm:$0xff] %v1169
    %1193 = vst [vmem:[#allocation7 + $0x80] sm:$0xff] %v634
    %1194 = vst [vmem:[#allocation7 + $0x88] sm:$0xff] %v636
    %1195 = vst [vmem:[#allocation7 + $0x90] sm:$0xff] %v711
    %1196 = vst [vmem:[#allocation7 + $0x98] sm:$0xff] %v713
    %1197 = vst [vmem:[#allocation7 + $0xa0] sm:$0xff] %v788
    %1198 = vst [vmem:[#allocation7 + $0xa8] sm:$0xff] %v790
    %1199 = vst [vmem:[#allocation7 + $0xb0] sm:$0xff] %v865
    %1200 = vst [vmem:[#allocation7 + $0xb8] sm:$0xff] %v867
    %1201 = vst [vmem:[#allocation7 + $0xc0] sm:$0xff] %v942
    %1202 = vst [vmem:[#allocation7 + $0xc8] sm:$0xff] %v944
    %1203 = vst [vmem:[#allocation7 + $0xd0] sm:$0xff] %v1019
    %1204 = vst [vmem:[#allocation7 + $0xd8] sm:$0xff] %v1021
    %1205 = vst [vmem:[#allocation7 + $0xe0] sm:$0xff] %v1096
    %1206 = vst [vmem:[#allocation7 + $0xe8] sm:$0xff] %v1098
    %1207 = vst [vmem:[#allocation7 + $0xf0] sm:$0xff] %v1173
    %1208 = vst [vmem:[#allocation7 + $0xf8] sm:$0xff] %v1175
    // Predicated region
    $region18: #{tpu_custom_call.1} parent=1 // pred_check
      _
    $region19: #{tpu_custom_call.1} parent=1 // pred_check_branch
      %1210 = sbr.rel (0) target = $region21
    $region20: #{tpu_custom_call.1} parent=1 // pred_region
      %s1212 = ssub.s32 4096, 4096
      %1213 = vsyncadd [#allocation4], %s1212
      %s1214 = sshll.u32 [#allocation7], 4
      %s1215 = int_to_ptr.vmem [resolvable:$true] %s1214
      %1220 = dma.vmem_to_hbm [thread:$0]  %s1215, 4096, %s2, [#allocation4], 2048, 2048, 128
    $region21: #{tpu_custom_call.1} parent=1 // pred_fallthru
      _
    // Predicated region
    $region22: #{tpu_custom_call.1} parent=1 // pred_check
      _
    $region23: #{tpu_custom_call.1} parent=1 // pred_check_branch
      %1222 = sbr.rel (0) target = $region25
    $region24: #{tpu_custom_call.1} parent=1 // pred_region
      %1223 = dma.done [#allocation4], 4096
    $region25: #{tpu_custom_call.1} parent=1 // pred_fallthru
      _
    %1224 = vsyncpa [#allocation3], 1
    %1225 = vsyncpa [#allocation6], 1
    %1226 = vsyncpa [#allocation4], 1

</llo_original>
